<compile_context>
chip_gen: v6e
topology: v6e:2x2x1
jax: 0.10.0
libtpu: 0.0.40
codegen_flags: <defaults>
</compile_context>

<pallas_src>
import functools

import jax
import jax.numpy as jnp
from jax.experimental import pallas as pl
from jax.experimental.pallas import tpu as pltpu


# ----------------------------------------------------------------------------
# Kernel 1: fused q/k/v grouped 1x1 conv, one stacked matmul per batch.
#   w_ref is the host-prebuilt (3C, C) block-diagonal weight with the softmax
#   scale already folded into the q rows.
# ----------------------------------------------------------------------------
def qkv_kernel(x_ref, w_ref, o_ref):
    # x_ref: (1, C, N), w_ref: (3C, C), o_ref: (1, 3C, N)
    o_ref[0] = jnp.dot(w_ref[...], x_ref[0], preferred_element_type=jnp.float32)


# ----------------------------------------------------------------------------
# Kernel 2: attention for all (batch, head) pairs in one shot + BatchNorm2d.
#   Everything (q/k/v, scores, probs, output, BN stats) stays resident in VMEM.
# ----------------------------------------------------------------------------
def attn_bn_kernel(qkv_ref, o_ref, *, batch, num_heads, eps):
    # qkv_ref: (3, B*H, N, Dh); scale already folded into q's weights.
    q = qkv_ref[0]
    k = qkv_ref[1]
    v = qkv_ref[2]

    # scores: contract last dims of q and k directly (no explicit k transpose)
    s = jnp.einsum('bqd,bkd->bqk', q, k, preferred_element_type=jnp.float32)
    s = s - jnp.max(s, axis=-1, keepdims=True)
    p = jnp.exp(s)
    denom = jnp.sum(p, axis=-1, keepdims=True)

    # un-normalized weighted values; normalization deferred (flash-style),
    # divide replaced by EUP approximate reciprocal.
    o = jnp.einsum('bqk,bkd->bqd', p, v, preferred_element_type=jnp.float32)
    o = o * pl.reciprocal(denom, approx=True)            # (B*H, N, Dh)

    bh, n, dh = o.shape
    y = o.reshape(batch, num_heads, n, dh)                # leading-dim split only

    # BatchNorm2d (train mode): per-channel (= per (head, dh)) biased stats
    # over (batch, spatial); gamma=1, beta=0 on a fresh module.
    cnt = float(batch * n)
    mean = jnp.sum(jnp.sum(y, axis=2, keepdims=True), axis=0, keepdims=True) / cnt
    d = y - mean
    var = jnp.sum(jnp.sum(d * d, axis=2, keepdims=True), axis=0, keepdims=True) / cnt
    o_ref[...] = d * jax.lax.rsqrt(var + eps)


# ----------------------------------------------------------------------------
# Parameter helpers
# ----------------------------------------------------------------------------
def block_diag_from_grouped(w, groups):
    """Grouped 1x1 Conv1d weight (C, C//groups) -> block-diagonal (C, C)."""
    C, cg = w.shape
    assert C == groups * cg
    bd = jnp.zeros((C, C), dtype=w.dtype)
    for g in range(groups):
        bd = bd.at[g * cg:(g + 1) * cg, g * cg:(g + 1) * cg].set(
            w[g * cg:(g + 1) * cg, :])
    return bd
    # Note: for large `dim` the grouped conv should instead be a batched
    # (groups, C/g, C/g) x (groups, C/g, N) matmul to skip the zero blocks;
    # at dim=32 the dense stacked matmul is both simpler and MXU-friendlier.


# ----------------------------------------------------------------------------
# Wrapper (jitted so the tiny layout glue between the two kernels fuses)
# ----------------------------------------------------------------------------
@functools.partial(jax.jit, static_argnames=("num_heads", "window_size", "eps"))
def window_attention_gfc(x, wq, wk, wv, *, num_heads, window_size, eps=1e-5):
    B, C, Hh, Ww = x.shape
    N = window_size * window_size
    assert Hh * Ww == N, "height*width must equal window_size**2"
    assert C % num_heads == 0
    Dh = C // num_heads
    scale = float(Dh) ** -0.5

    x3 = x.reshape(B, C, N).astype(jnp.float32)

    # Stack the three block-diagonal weights into one (3C, C) matrix; fold the
    # softmax scale into the q rows (zero runtime cost, removes a VPU mul).
    w_all = jnp.concatenate(
        [block_diag_from_grouped(wq, window_size) * scale,
         block_diag_from_grouped(wk, window_size),
         block_diag_from_grouped(wv, window_size)], axis=0).astype(jnp.float32)

    # --- kernel 1: q/k/v in a single matmul per batch ------------------------
    qkv = pl.pallas_call(
        qkv_kernel,
        out_shape=jax.ShapeDtypeStruct((B, 3 * C, N), jnp.float32),
        grid=(B,),
        in_specs=[
            pl.BlockSpec((1, C, N), lambda b: (b, 0, 0)),
            pl.BlockSpec((3 * C, C), lambda b: (0, 0)),
        ],
        out_specs=pl.BlockSpec((1, 3 * C, N), lambda b: (b, 0, 0)),
        compiler_params=pltpu.CompilerParams(
            dimension_semantics=("parallel",)),   # shards over windows (v7x 2-TC)
    )(x3, w_all)

    # glue (pure layout, one tiny XLA transpose): replicates torch's row-major
    # q.reshape(B, N, H, Dh).permute(0, 2, 1, 3) for q, k and v at once.
    # (B, 3C, N) -> (B,3,C,N) -> (B,3,N,H,Dh) -> (3,B,H,N,Dh) -> (3, B*H, N, Dh)
    qkv = (qkv.reshape(B, 3, C, N)
               .reshape(B, 3, N, num_heads, Dh)
               .transpose(1, 0, 3, 2, 4)
               .reshape(3, B * num_heads, N, Dh))

    # --- kernel 2: attention (all heads/batches at once) + BatchNorm2d -------
    # TODO(synk): for realistic window counts this ungridded whole-array call
    # should be blocked over B*H with a cross-step BN reduction (v7x has only
    # 64 MiB VMEM); at these shapes everything fits trivially.
    y = pl.pallas_call(
        functools.partial(attn_bn_kernel, batch=B, num_heads=num_heads, eps=eps),
        out_shape=jax.ShapeDtypeStruct((B, num_heads, N, Dh), jnp.float32),
    )(qkv)

    # glue: (B,H,N,Dh) -> (B,H,Dh,N) -> (B,C,N) (channel = h*Dh + d), matching
    # (attn@v).transpose(1,2).reshape(B,N,C).permute(0,2,1); then to NCHW.
    out = (y.transpose(0, 1, 3, 2)
             .reshape(B, C, N)
             .reshape(B, C, window_size, window_size))
    return out


if __name__ == "__main__":
    key = jax.random.PRNGKey(0)
    B, dim, window_size, num_heads = 2, 32, 4, 4     # N = 16, Dh = 8, groups = 4

    k_x, k_q, k_k, k_v = jax.random.split(key, 4)
    x = jax.random.normal(k_x, (B, dim, window_size, window_size), jnp.float32)

    # Conv1d(dim, dim, 1, groups=window_size, bias=False) weights: (dim, dim//ws)
    wq = 0.05 * jax.random.normal(k_q, (dim, dim // window_size), jnp.float32)
    wk = 0.05 * jax.random.normal(k_k, (dim, dim // window_size), jnp.float32)
    wv = 0.05 * jax.random.normal(k_v, (dim, dim // window_size), jnp.float32)

    # TODO(synk): relative_position_bias_table / self.proj exist in __init__ but
    # are unused in forward (pos_emb=False, proj never called) -> omitted.
    out = window_attention_gfc(x, wq, wk, wv,
                               num_heads=num_heads, window_size=window_size)
    jax.block_until_ready(out)
    assert out.shape == (B, dim, window_size, window_size)
    print("KERNEL_OK")
</pallas_src>

<mosaic_0001>
module attributes {stable_mosaic.version = 11 : i64} {
  func.func @qkv_kernel(%arg0: i32, %arg1: memref<1x32x16xf32, #tpu.memory_space<vmem>>, %arg2: memref<96x32xf32, #tpu.memory_space<vmem>>, %arg3: memref<1x96x16xf32, #tpu.memory_space<vmem>>) attributes {dimension_semantics = [#tpu.dimension_semantics<parallel>], iteration_bounds = array<i64: 2>, scalar_prefetch = 0 : i64, scratch_operands = 0 : i64, tpu.core_type = #tpu.core_type<tc>, window_params = [{transform_indices = @transform_0, window_bounds = array<i64: 1, 32, 16>}, {pipeline_mode = #tpu.pipeline_mode<synchronous>, transform_indices = @transform_1, window_bounds = array<i64: 96, 32>}, {transform_indices = @transform_2, window_bounds = array<i64: 1, 96, 16>}]} {
    %c0 = arith.constant 0 : index
    %c0_0 = arith.constant 0 : index
    %0 = vector.load %arg2[%c0, %c0_0] : memref<96x32xf32, #tpu.memory_space<vmem>>, vector<96x32xf32>
    %c0_1 = arith.constant 0 : index
    %c0_2 = arith.constant 0 : index
    %c0_3 = arith.constant 0 : index
    %1 = vector.load %arg1[%c0_1, %c0_2, %c0_3] : memref<1x32x16xf32, #tpu.memory_space<vmem>>, vector<1x32x16xf32>
    %2 = vector.shape_cast %1 : vector<1x32x16xf32> to vector<32x16xf32>
    %cst = arith.constant dense<0.000000e+00> : vector<96x16xf32>
    %3 = tpu.matmul %0, %2, %cst {dimension_numbers = #tpu.dot_dimension_numbers<[1], [0], [0], [1], [0, 0, 1, 1], [], []>} : vector<96x32xf32>, vector<32x16xf32>, vector<96x16xf32> -> vector<96x16xf32>
    %c0_4 = arith.constant 0 : index
    %c0_5 = arith.constant 0 : index
    %c0_6 = arith.constant 0 : index
    %4 = vector.load %arg3[%c0_4, %c0_5, %c0_6] : memref<1x96x16xf32, #tpu.memory_space<vmem>>, vector<1x96x16xf32>
    %5 = vector.shape_cast %4 : vector<1x96x16xf32> to vector<96x16xf32>
    %6 = vector.shape_cast %3 : vector<96x16xf32> to vector<1x96x16xf32>
    tpu.vector_store %arg3[%c0_4, %c0_5, %c0_6], %6 {strides = array<i32>} : memref<1x96x16xf32, #tpu.memory_space<vmem>>, vector<1x96x16xf32>,
    return
  }
  func.func @transform_0(%arg0: i32) -> (i32, i32, i32) {
    %c0_i32 = arith.constant 0 : i32
    %c0_i32_0 = arith.constant 0 : i32
    %c0_i32_1 = arith.constant 0 : i32
    return %arg0, %c0_i32, %c0_i32_0 : i32, i32, i32
  }
  func.func @transform_1(%arg0: i32) -> (i32, i32) {
    %c0_i32 = arith.constant 0 : i32
    %c0_i32_0 = arith.constant 0 : i32
    %c0_i32_1 = arith.constant 0 : i32
    return %c0_i32, %c0_i32_0 : i32, i32
  }
  func.func @transform_2(%arg0: i32) -> (i32, i32, i32) {
    %c0_i32 = arith.constant 0 : i32
    %c0_i32_0 = arith.constant 0 : i32
    %c0_i32_1 = arith.constant 0 : i32
    return %arg0, %c0_i32, %c0_i32_0 : i32, i32, i32
  }
}

module attributes {stable_mosaic.version = 11 : i64} {
  func.func @attn_bn_kernel(%arg0: memref<3x8x16x8xf32, #tpu.memory_space<vmem>>, %arg1: memref<2x4x16x8xf32, #tpu.memory_space<vmem>>) attributes {dimension_semantics = [], scalar_prefetch = 0 : i64, scratch_operands = 0 : i64, tpu.core_type = #tpu.core_type<tc>} {
    %c0 = arith.constant 0 : index
    %c0_0 = arith.constant 0 : index
    %c0_1 = arith.constant 0 : index
    %c0_2 = arith.constant 0 : index
    %0 = vector.load %arg0[%c0, %c0_0, %c0_1, %c0_2] : memref<3x8x16x8xf32, #tpu.memory_space<vmem>>, vector<1x8x16x8xf32>
    %1 = vector.shape_cast %0 : vector<1x8x16x8xf32> to vector<8x16x8xf32>
    %c1 = arith.constant 1 : index
    %c0_3 = arith.constant 0 : index
    %c0_4 = arith.constant 0 : index
    %c0_5 = arith.constant 0 : index
    %2 = vector.load %arg0[%c1, %c0_3, %c0_4, %c0_5] : memref<3x8x16x8xf32, #tpu.memory_space<vmem>>, vector<1x8x16x8xf32>
    %3 = vector.shape_cast %2 : vector<1x8x16x8xf32> to vector<8x16x8xf32>
    %c2 = arith.constant 2 : index
    %c0_6 = arith.constant 0 : index
    %c0_7 = arith.constant 0 : index
    %c0_8 = arith.constant 0 : index
    %4 = vector.load %arg0[%c2, %c0_6, %c0_7, %c0_8] : memref<3x8x16x8xf32, #tpu.memory_space<vmem>>, vector<1x8x16x8xf32>
    %5 = vector.shape_cast %4 : vector<1x8x16x8xf32> to vector<8x16x8xf32>
    "tpu.trace_start"() <{level = 10 : i32, message = "bqd,bkd->bqk"}> : () -> ()
    %cst = arith.constant dense<0.000000e+00> : vector<8x16x16xf32>
    %6 = tpu.matmul %1, %3, %cst {dimension_numbers = #tpu.dot_dimension_numbers<[2], [2], [1], [1], [0, 0, 0, 1, 1, 1], [0], [0]>} : vector<8x16x8xf32>, vector<8x16x8xf32>, vector<8x16x16xf32> -> vector<8x16x16xf32>
    "tpu.trace_stop"() : () -> ()
    %cst_9 = arith.constant dense<0xFF800000> : vector<8x16xf32>
    %7 = vector.multi_reduction <maximumf>, %6, %cst_9 [2] : vector<8x16x16xf32> to vector<8x16xf32>
    %8 = vector.shape_cast %7 : vector<8x16xf32> to vector<8x16x1xf32>
    %9 = vector.broadcast %8 : vector<8x16x1xf32> to vector<8x16x16xf32>
    %10 = arith.subf %6, %9 : vector<8x16x16xf32>
    %11 = math.exp %10 : vector<8x16x16xf32>
    %cst_10 = arith.constant dense<0.000000e+00> : vector<8x16xf32>
    %12 = vector.multi_reduction <add>, %11, %cst_10 [2] : vector<8x16x16xf32> to vector<8x16xf32>
    %13 = vector.shape_cast %12 : vector<8x16xf32> to vector<8x16x1xf32>
    "tpu.trace_start"() <{level = 10 : i32, message = "bqk,bkd->bqd"}> : () -> ()
    %cst_11 = arith.constant dense<0.000000e+00> : vector<8x16x8xf32>
    %14 = tpu.matmul %11, %5, %cst_11 {dimension_numbers = #tpu.dot_dimension_numbers<[2], [1], [1], [2], [0, 0, 0, 1, 1, 2], [0], [0]>} : vector<8x16x16xf32>, vector<8x16x8xf32>, vector<8x16x8xf32> -> vector<8x16x8xf32>
    "tpu.trace_stop"() : () -> ()
    %15 = tpu.reciprocal %13 {approx = true} : vector<8x16x1xf32> -> vector<8x16x1xf32>
    %16 = vector.broadcast %15 : vector<8x16x1xf32> to vector<8x16x8xf32>
    %17 = arith.mulf %14, %16 : vector<8x16x8xf32>
    %18 = vector.shape_cast %17 : vector<8x16x8xf32> to vector<2x4x16x8xf32>
    %cst_12 = arith.constant dense<0.000000e+00> : vector<2x4x8xf32>
    %19 = vector.multi_reduction <add>, %18, %cst_12 [2] : vector<2x4x16x8xf32> to vector<2x4x8xf32>
    %20 = vector.shape_cast %19 : vector<2x4x8xf32> to vector<2x4x1x8xf32>
    %cst_13 = arith.constant dense<0.000000e+00> : vector<4x1x8xf32>
    %21 = vector.multi_reduction <add>, %20, %cst_13 [0] : vector<2x4x1x8xf32> to vector<4x1x8xf32>
    %22 = vector.shape_cast %21 : vector<4x1x8xf32> to vector<1x4x1x8xf32>
    %cst_14 = arith.constant 3.200000e+01 : f32
    %23 = vector.broadcast %cst_14 : f32 to vector<1x4x1x8xf32>
    %24 = arith.divf %22, %23 : vector<1x4x1x8xf32>
    %25 = vector.broadcast %24 : vector<1x4x1x8xf32> to vector<2x4x16x8xf32>
    %26 = arith.subf %18, %25 : vector<2x4x16x8xf32>
    %27 = arith.mulf %26, %26 : vector<2x4x16x8xf32>
    %cst_15 = arith.constant dense<0.000000e+00> : vector<2x4x8xf32>
    %28 = vector.multi_reduction <add>, %27, %cst_15 [2] : vector<2x4x16x8xf32> to vector<2x4x8xf32>
    %29 = vector.shape_cast %28 : vector<2x4x8xf32> to vector<2x4x1x8xf32>
    %cst_16 = arith.constant dense<0.000000e+00> : vector<4x1x8xf32>
    %30 = vector.multi_reduction <add>, %29, %cst_16 [0] : vector<2x4x1x8xf32> to vector<4x1x8xf32>
    %31 = vector.shape_cast %30 : vector<4x1x8xf32> to vector<1x4x1x8xf32>
    %cst_17 = arith.constant 3.200000e+01 : f32
    %32 = vector.broadcast %cst_17 : f32 to vector<1x4x1x8xf32>
    %33 = arith.divf %31, %32 : vector<1x4x1x8xf32>
    %cst_18 = arith.constant 9.99999974E-6 : f32
    %34 = vector.broadcast %cst_18 : f32 to vector<1x4x1x8xf32>
    %35 = arith.addf %33, %34 : vector<1x4x1x8xf32>
    %36 = math.rsqrt %35 : vector<1x4x1x8xf32>
    %37 = vector.broadcast %36 : vector<1x4x1x8xf32> to vector<2x4x16x8xf32>
    %38 = arith.mulf %26, %37 : vector<2x4x16x8xf32>
    %c0_19 = arith.constant 0 : index
    %c0_20 = arith.constant 0 : index
    %c0_21 = arith.constant 0 : index
    %c0_22 = arith.constant 0 : index
    %39 = vector.load %arg1[%c0_19, %c0_20, %c0_21, %c0_22] : memref<2x4x16x8xf32, #tpu.memory_space<vmem>>, vector<2x4x16x8xf32>
    tpu.vector_store %arg1[%c0_19, %c0_20, %c0_21, %c0_22], %38 {strides = array<i32>} : memref<2x4x16x8xf32, #tpu.memory_space<vmem>>, vector<2x4x16x8xf32>,
    return
  }
}

</mosaic_0001>

<llo_original>
// kernel: window_attention_gfc.2
$region0: #{window_attention_gfc.2}
  #allocation0 [shape = 'u32[]', space=smem, size = 0x4, offset = 0x4, fixed_abs, tag = 'smem constant byte address 0x4 - core index']
  #allocation1 [shape = 'u32[144,128]{1,0:T(1,128)}', space=vmem, size = 0x12000, scoped, tag = 'internal scratch']
  %s0 = inlined_call_operand.vmem [shape: f32[2,32,16], index: 0, kind: input, shape index: {}]
  %s1 = inlined_call_operand.vmem [shape: f32[96,32], index: 1, kind: input, shape index: {}]
  %s2 = inlined_call_operand.vmem [shape: f32[2,96,16], index: 2, kind: output, shape index: {}]
  %s3 = sld [smem:[#allocation0]]
  $region41: #{window_attention_gfc.2} parent=0
    _
  %s5 = ssub.s32 1, %s3
  %s6 = scalar_select 0, %s5, %s3
  loop: start=0, step=1, limit=4
  $region2: #{window_attention_gfc.2} parent=0 // loop_pre_header
    _
  $region3: #{window_attention_gfc.2} parent=0 // loop_header
    %s8 = sphi 0, %s12
    %p9 = scmp.ge.s32.totalorder %s8, 4
    %s18 = sphi 0, %s20
    %s21 = sphi 0, %s18
    %s22 = sphi 0, %s21
    %s38 = sphi 0, %s22
    %s42 = sphi 0, %s42
    %s44 = sphi 0, %s42
    %s45 = sphi 0, %s44
    %s59 = sphi 0, %s45
    %s65 = sphi 0, %s67
    %s68 = sphi 0, %s65
    %s69 = sphi 0, %s68
    %s85 = sphi 0, %s69
  $region4: #{window_attention_gfc.2} parent=0 // loop_header_branch
    %11 = sbr.rel (%p9) target = $region8
  $region5: #{window_attention_gfc.2} parent=0 // loop_body
    %s13 = ssub.s32 %s8, 1
    %s14 = ssub.s32 %s8, 2
    %s15 = sadd.s32 %s8, 1
    %s16 = ssub.s32 %s8, %s15
    %p17 = scmp.eq.s32.totalorder %s16, 0
    %s19 = sadd.s32 %s18, 1
    %s20 = scalar_select %p17, %s18, %s19
    %p23 = pneg %p17
    %p24 = scmp.eq.s32.totalorder %s8, 1
    %p25 = por %p23, %p24
    %p26 = scmp.ne.s32.totalorder %s18, %s21
    %p27 = scmp.eq.s32.totalorder %s8, 0
    %p28 = por %p26, %p27
    %p29 = scmp.ne.s32.totalorder %s18, %s21
    %p30 = scmp.eq.s32.totalorder %s13, 1
    %p31 = por %p29, %p30
    %p32 = scmp.ne.s32.totalorder %s21, %s22
    %p33 = scmp.eq.s32.totalorder %s13, 0
    %p34 = por %p32, %p33
    %p35 = scmp.ne.s32.totalorder %s21, %s22
    %p36 = scmp.eq.s32.totalorder %s14, 1
    %p37 = por %p35, %p36
    %p39 = scmp.ne.s32.totalorder %s22, %s38
    %p40 = scmp.eq.s32.totalorder %s14, 0
    %p41 = por %p39, %p40
    %s43 = sadd.s32 %s42, 1
    %p46 = scmp.eq.s32.totalorder %s8, 1
    %p47 = scmp.ne.s32.totalorder %s42, %s44
    %p48 = scmp.eq.s32.totalorder %s8, 0
    %p49 = por %p47, %p48
    %p50 = scmp.ne.s32.totalorder %s42, %s44
    %p51 = scmp.eq.s32.totalorder %s13, 1
    %p52 = por %p50, %p51
    %p53 = scmp.ne.s32.totalorder %s44, %s45
    %p54 = scmp.eq.s32.totalorder %s13, 0
    %p55 = por %p53, %p54
    %p56 = scmp.ne.s32.totalorder %s44, %s45
    %p57 = scmp.eq.s32.totalorder %s14, 1
    %p58 = por %p56, %p57
    %p60 = scmp.ne.s32.totalorder %s45, %s59
    %p61 = scmp.eq.s32.totalorder %s14, 0
    %p62 = por %p60, %p61
    %s63 = ssub.s32 %s8, %s15
    %p64 = scmp.eq.s32.totalorder %s63, 0
    %s66 = sadd.s32 %s65, 1
    %s67 = scalar_select %p64, %s65, %s66
    %p70 = pneg %p64
    %p71 = scmp.eq.s32.totalorder %s8, 1
    %p72 = por %p70, %p71
    %p73 = scmp.ne.s32.totalorder %s65, %s68
    %p74 = scmp.eq.s32.totalorder %s8, 0
    %p75 = por %p73, %p74
    %p76 = scmp.ne.s32.totalorder %s65, %s68
    %p77 = scmp.eq.s32.totalorder %s13, 1
    %p78 = por %p76, %p77
    %p79 = scmp.ne.s32.totalorder %s68, %s69
    %p80 = scmp.eq.s32.totalorder %s13, 0
    %p81 = por %p79, %p80
    %p82 = scmp.ne.s32.totalorder %s68, %s69
    %p83 = scmp.eq.s32.totalorder %s14, 1
    %p84 = por %p82, %p83
    %p86 = scmp.ne.s32.totalorder %s69, %s85
    %p87 = scmp.eq.s32.totalorder %s14, 0
    %p88 = por %p86, %p87
    %p89 = scmp.le.s32.totalorder 1, %s8
    %p90 = scmp.lt.s32.totalorder %s8, 3
    %p91 = pnand %p89, %p90
    %p92 = pneg %p91
    // Predicated region
    $region9: #{window_attention_gfc.2} parent=5 // pred_check
      _
    $region10: #{window_attention_gfc.2} parent=5 // pred_check_branch
      %94 = sbr.rel (%p91) target = $region12
    $region11: #{window_attention_gfc.2} parent=5 // pred_region
      %s95 = ssub.s32 %s8, 1
      // Predicated region
      $region13: #{window_attention_gfc.2} parent=11 // pred_check
        %p96 = pneg %p55
      $region14: #{window_attention_gfc.2} parent=11 // pred_check_branch
        %98 = sbr.rel (%p96) target = $region16
      $region15: #{window_attention_gfc.2} parent=11 // pred_region
        _
      $region16: #{window_attention_gfc.2} parent=11 // pred_fallthru
        _
    $region12: #{window_attention_gfc.2} parent=5 // pred_fallthru
      _
    %p99 = scmp.lt.s32.totalorder %s8, 2
    // Predicated region
    $region17: #{window_attention_gfc.2} parent=5 // pred_check
      %p100 = pneg %p99
    $region18: #{window_attention_gfc.2} parent=5 // pred_check_branch
      %102 = sbr.rel (%p100) target = $region20
    $region19: #{window_attention_gfc.2} parent=5 // pred_region
      // Predicated region
      $region21: #{window_attention_gfc.2} parent=19 // pred_check
        %p103 = pneg %p28
      $region22: #{window_attention_gfc.2} parent=19 // pred_check_branch
        %105 = sbr.rel (%p103) target = $region24
      $region23: #{window_attention_gfc.2} parent=19 // pred_region
        %p106 = scmp.lt.s32.totalorder %s8, 1
        %s107 = scalar_select %p106, %s8, 1
        %s108 = smul.addr %s107, 4
        %s109 = smul.addr %s108, 8
        %s110 = scalar_lea.vmem %s0, %s109
      $region24: #{window_attention_gfc.2} parent=19 // pred_fallthru
        _
    $region20: #{window_attention_gfc.2} parent=5 // pred_fallthru
      _
    %p111 = scmp.le.s32.totalorder 1, %s8
    %p112 = scmp.lt.s32.totalorder %s8, 3
    %p113 = pnand %p111, %p112
    %p114 = pneg %p113
    // Predicated region
    $region25: #{window_attention_gfc.2} parent=5 // pred_check
      _
    $region26: #{window_attention_gfc.2} parent=5 // pred_check_branch
      %116 = sbr.rel (%p113) target = $region28
    $region27: #{window_attention_gfc.2} parent=5 // pred_region
      %s117 = ssub.s32 %s8, 1
      %p118 = scmp.lt.s32.totalorder %s13, 1
      %s119 = scalar_select %p118, %s13, 1
      %s120 = smul.addr %s119, 4
      %s121 = smul.addr %s120, 8
      %s122 = scalar_lea.vmem %s0, %s121
      %p123 = pneg %p34
      %p124 = pneg %p31
      %p125 = pneg %p55
      %p126 = pneg %p52
      %p127 = pneg %p81
      %p128 = pneg %p78
      %p129 = scmp.lt.s32.totalorder %s13, 1
      %s130 = scalar_select %p129, %s13, 1
      %s131 = smul.addr %s130, 12
      %s132 = smul.addr %s131, 8
      %s133 = scalar_lea.vmem %s2, %s132
      %p134 = scmp.lt.s32.totalorder %s13, 1
      %s135 = scalar_select %p134, %s13, 1
      %s136 = smul.addr %s135, 4
      %s137 = smul.addr %s136, 8
      %s138 = scalar_lea.vmem %s0, %s137
      %p139 = scmp.lt.s32.totalorder %s13, 1
      %s140 = scalar_select %p139, %s13, 1
      %s141 = smul.addr %s140, 12
      %s142 = smul.addr %s141, 8
      %s143 = scalar_lea.vmem %s2, %s142
      %v144 = vld [vmem:[%s1] sm:$0xff]
      %v145 = vld [vmem:[%s1 + $0x8] sm:$0xff]
      %v146 = vld [vmem:[%s1 + $0x10] sm:$0xff]
      %v147 = vld [vmem:[%s1 + $0x18] sm:$0xff]
      %v148 = vld [vmem:[%s1 + $0x20] sm:$0xff]
      %v149 = vld [vmem:[%s1 + $0x28] sm:$0xff]
      %v150 = vld [vmem:[%s1 + $0x30] sm:$0xff]
      %v151 = vld [vmem:[%s1 + $0x38] sm:$0xff]
      %v152 = vld [vmem:[%s1 + $0x40] sm:$0xff]
      %v153 = vld [vmem:[%s1 + $0x48] sm:$0xff]
      %v154 = vld [vmem:[%s1 + $0x50] sm:$0xff]
      %v155 = vld [vmem:[%s1 + $0x58] sm:$0xff]
      %v156 = vld [vmem:[%s138] sm:$0xff]
      %v157 = vld [vmem:[%s138 + $0x8] sm:$0xff]
      %v158 = vld [vmem:[%s138 + $0x10] sm:$0xff]
      %v159 = vld [vmem:[%s138 + $0x18] sm:$0xff]
      %vm160 = vcmask 261120
      %v162 = vsel %vm160, %v144, 0
      %v165 = vsel %vm160, %v145, 0
      %v168 = vsel %vm160, %v146, 0
      %v171 = vsel %vm160, %v147, 0
      %v174 = vsel %vm160, %v148, 0
      %v177 = vsel %vm160, %v149, 0
      %v180 = vsel %vm160, %v150, 0
      %v183 = vsel %vm160, %v151, 0
      %v186 = vsel %vm160, %v152, 0
      %v189 = vsel %vm160, %v153, 0
      %v192 = vsel %vm160, %v154, 0
      %v195 = vsel %vm160, %v155, 0
      %197 = vmatprep.subr.mxu0 0.0
      %198 = vmatpush1.msra.mxu0 0.0
      %199 = vmatprep.subr.mxu0 0.0
      %200 = vmatpush1.msra.mxu0 0.0
      %201 = vmatprep.subr.mxu0 0.0
      %202 = vmatpush1.msra.mxu0 0.0
      %203 = vmatprep.subr.mxu0 0.0
      %204 = vmatpush1.msra.mxu0 0.0
      %205 = vmatprep.subr.mxu0 0.0
      %206 = vmatpush1.msra.mxu0 0.0
      %207 = vmatprep.subr.mxu0 0.0
      %208 = vmatpush1.msra.mxu0 0.0
      %209 = vmatprep.subr.mxu0 0.0
      %210 = vmatpush1.msra.mxu0 0.0
      %211 = vmatprep.subr.mxu0 0.0
      %212 = vmatpush1.msra.mxu0 0.0
      %213 = vmatprep.subr.mxu0 0.0
      %214 = vmatpush1.msra.mxu0 0.0
      %215 = vmatprep.subr.mxu0 0.0
      %216 = vmatpush1.msra.mxu0 0.0
      %217 = vmatprep.subr.mxu0 0.0
      %218 = vmatpush1.msra.mxu0 0.0
      %219 = vmatprep.subr.mxu0 0.0
      %220 = vmatpush1.msra.mxu0 0.0
      %221 = vmatprep.subr.mxu0 0.0
      %222 = vmatpush1.msra.mxu0 %v159
      %223 = vmatprep.subr.mxu0 0.0
      %224 = vmatpush1.msra.mxu0 %v158
      %225 = vmatprep.subr.mxu0 0.0
      %226 = vmatpush1.msra.mxu0 %v157
      %227 = vmatprep.subr.mxu0 0.0
      %228 = vmatpush1.msra.mxu0 %v156
      %229 = vmatprep.subr.mxu0 0.0
      %230 = vmatpush2.msra.mxu0 0.0
      %231 = vmatprep.subr.mxu0 0.0
      %232 = vmatpush2.msra.mxu0 0.0
      %233 = vmatprep.subr.mxu0 0.0
      %234 = vmatpush2.msra.mxu0 0.0
      %235 = vmatprep.subr.mxu0 0.0
      %236 = vmatpush2.msra.mxu0 0.0
      %237 = vmatprep.subr.mxu0 0.0
      %238 = vmatpush2.msra.mxu0 0.0
      %239 = vmatprep.subr.mxu0 0.0
      %240 = vmatpush2.msra.mxu0 0.0
      %241 = vmatprep.subr.mxu0 0.0
      %242 = vmatpush2.msra.mxu0 0.0
      %243 = vmatprep.subr.mxu0 0.0
      %244 = vmatpush2.msra.mxu0 0.0
      %245 = vmatprep.subr.mxu0 0.0
      %246 = vmatpush2.msra.mxu0 0.0
      %247 = vmatprep.subr.mxu0 0.0
      %248 = vmatpush2.msra.mxu0 0.0
      %249 = vmatprep.subr.mxu0 0.0
      %250 = vmatpush2.msra.mxu0 0.0
      %251 = vmatprep.subr.mxu0 0.0
      %252 = vmatpush2.msra.mxu0 0.0
      %253 = vmatprep.subr.mxu0 0.0
      %254 = vmatpush2.msra.mxu0 0.0
      %255 = vmatprep.subr.mxu0 0.0
      %256 = vmatpush2.msra.mxu0 0.0
      %257 = vmatprep.subr.mxu0 0.0
      %258 = vmatpush2.msra.mxu0 0.0
      %259 = vmatprep.subr.mxu0 0.0
      %260 = vmatpush2.msra.mxu0 0.0
      %261 = vmatprep.mubr.f32.mxu0 0.0
      %262 = vmatmul.mubr.f32.gmra.mxu0 %v162
      %v263 = vpop.f32.mrf.mxu0
      %v264 = vadd.f32 0.0, %v263
      %v265 = vpop.f32.mrf.mxu0
      %266 = vmatprep.mubr.f32.mxu0 0.0
      %267 = vmatmul.mubr.f32.gmra.mxu0 %v165
      %v268 = vpop.f32.mrf.mxu0
      %v269 = vadd.f32 0.0, %v268
      %v270 = vpop.f32.mrf.mxu0
      %271 = vmatprep.mubr.f32.mxu0 0.0
      %272 = vmatmul.mubr.f32.gmra.mxu0 %v168
      %v273 = vpop.f32.mrf.mxu0
      %v274 = vadd.f32 0.0, %v273
      %v275 = vpop.f32.mrf.mxu0
      %276 = vmatprep.mubr.f32.mxu0 0.0
      %277 = vmatmul.mubr.f32.gmra.mxu0 %v171
      %v278 = vpop.f32.mrf.mxu0
      %v279 = vadd.f32 0.0, %v278
      %v280 = vpop.f32.mrf.mxu0
      %281 = vmatprep.mubr.f32.mxu0 0.0
      %282 = vmatmul.mubr.f32.gmra.mxu0 %v174
      %v283 = vpop.f32.mrf.mxu0
      %v284 = vadd.f32 0.0, %v283
      %v285 = vpop.f32.mrf.mxu0
      %286 = vmatprep.mubr.f32.mxu0 0.0
      %287 = vmatmul.mubr.f32.gmra.mxu0 %v177
      %v288 = vpop.f32.mrf.mxu0
      %v289 = vadd.f32 0.0, %v288
      %v290 = vpop.f32.mrf.mxu0
      %291 = vmatprep.mubr.f32.mxu0 0.0
      %292 = vmatmul.mubr.f32.gmra.mxu0 %v180
      %v293 = vpop.f32.mrf.mxu0
      %v294 = vadd.f32 0.0, %v293
      %v295 = vpop.f32.mrf.mxu0
      %296 = vmatprep.mubr.f32.mxu0 0.0
      %297 = vmatmul.mubr.f32.gmra.mxu0 %v183
      %v298 = vpop.f32.mrf.mxu0
      %v299 = vadd.f32 0.0, %v298
      %v300 = vpop.f32.mrf.mxu0
      %301 = vmatprep.mubr.f32.mxu0 0.0
      %302 = vmatmul.mubr.f32.gmra.mxu0 %v186
      %v303 = vpop.f32.mrf.mxu0
      %v304 = vadd.f32 0.0, %v303
      %v305 = vpop.f32.mrf.mxu0
      %306 = vmatprep.mubr.f32.mxu0 0.0
      %307 = vmatmul.mubr.f32.gmra.mxu0 %v189
      %v308 = vpop.f32.mrf.mxu0
      %v309 = vadd.f32 0.0, %v308
      %v310 = vpop.f32.mrf.mxu0
      %311 = vmatprep.mubr.f32.mxu0 0.0
      %312 = vmatmul.mubr.f32.gmra.mxu0 %v192
      %v313 = vpop.f32.mrf.mxu0
      %v314 = vadd.f32 0.0, %v313
      %v315 = vpop.f32.mrf.mxu0
      %316 = vmatprep.mubr.f32.mxu0 0.0
      %317 = vmatmul.mubr.f32.gmra.mxu0 %v195
      %v318 = vpop.f32.mrf.mxu0
      %v319 = vadd.f32 0.0, %v318
      %v320 = vpop.f32.mrf.mxu0
      %321 = vdwg.mxu0
      %vm322 = vcmask 130048
      %323 = vst.msk [vmem:[%s143] sm:$0xff] %vm322, %v264
      %324 = vst.msk [vmem:[%s143 + $0x8] sm:$0xff] %vm322, %v269
      %325 = vst.msk [vmem:[%s143 + $0x10] sm:$0xff] %vm322, %v274
      %326 = vst.msk [vmem:[%s143 + $0x18] sm:$0xff] %vm322, %v279
      %327 = vst.msk [vmem:[%s143 + $0x20] sm:$0xff] %vm322, %v284
      %328 = vst.msk [vmem:[%s143 + $0x28] sm:$0xff] %vm322, %v289
      %329 = vst.msk [vmem:[%s143 + $0x30] sm:$0xff] %vm322, %v294
      %330 = vst.msk [vmem:[%s143 + $0x38] sm:$0xff] %vm322, %v299
      %331 = vst.msk [vmem:[%s143 + $0x40] sm:$0xff] %vm322, %v304
      %332 = vst.msk [vmem:[%s143 + $0x48] sm:$0xff] %vm322, %v309
      %333 = vst.msk [vmem:[%s143 + $0x50] sm:$0xff] %vm322, %v314
      %334 = vst.msk [vmem:[%s143 + $0x58] sm:$0xff] %vm322, %v319
      %p335 = scmp.lt.s32.totalorder %s13, 1
      %s336 = scalar_select %p335, %s13, 1
      %s337 = smul.addr %s336, 12
      %s338 = smul.addr %s337, 8
      %s339 = scalar_lea.vmem %s2, %s338
      // Predicated region
      $region29: #{window_attention_gfc.2} parent=27 // pred_check
        %p340 = pneg %p78
      $region30: #{window_attention_gfc.2} parent=27 // pred_check_branch
        %342 = sbr.rel (%p340) target = $region32
      $region31: #{window_attention_gfc.2} parent=27 // pred_region
        _
      $region32: #{window_attention_gfc.2} parent=27 // pred_fallthru
        _
    $region28: #{window_attention_gfc.2} parent=5 // pred_fallthru
      _
    %p343 = scmp.le.s32.totalorder 2, %s8
    // Predicated region
    $region33: #{window_attention_gfc.2} parent=5 // pred_check
      %p344 = pneg %p343
    $region34: #{window_attention_gfc.2} parent=5 // pred_check_branch
      %346 = sbr.rel (%p344) target = $region36
    $region35: #{window_attention_gfc.2} parent=5 // pred_region
      %s347 = ssub.s32 %s8, 2
      // Predicated region
      $region37: #{window_attention_gfc.2} parent=35 // pred_check
        %p348 = pneg %p84
      $region38: #{window_attention_gfc.2} parent=35 // pred_check_branch
        %350 = sbr.rel (%p348) target = $region40
      $region39: #{window_attention_gfc.2} parent=35 // pred_region
        %p351 = scmp.lt.s32.totalorder %s14, 1
        %s352 = scalar_select %p351, %s14, 1
        %s353 = smul.addr %s352, 12
        %s354 = smul.addr %s353, 8
        %s355 = scalar_lea.vmem %s2, %s354
      $region40: #{window_attention_gfc.2} parent=35 // pred_fallthru
        _
    $region36: #{window_attention_gfc.2} parent=5 // pred_fallthru
      _
  $region6: #{window_attention_gfc.2} parent=0 // loop_footer
    %s12 = sadd.s32 1, %s8
  $region7: #{window_attention_gfc.2} parent=0 // loop_footer_branch
    %7 = sbr.rel target = $region3
  $region8: #{window_attention_gfc.2} parent=0 // loop_exit
    _

// kernel: window_attention_gfc.3
$region0: #{window_attention_gfc.3}
  #allocation0 [shape = 'u32[]', space=smem, size = 0x4, offset = 0x4, fixed_abs, tag = 'smem constant byte address 0x4 - core index']
  #allocation1 [shape = 'u32[144,128]{1,0:T(1,128)}', space=vmem, size = 0x12000, scoped, tag = 'internal scratch']
  %s0 = inlined_call_operand.vmem [shape: f32[3,8,16,8], index: 0, kind: input, shape index: {}]
  %s1 = inlined_call_operand.vmem [shape: f32[2,4,16,8], index: 1, kind: output, shape index: {}]
  %s2 = sld [smem:[#allocation0]]
  $region14: #{window_attention_gfc.3} parent=0
    _
  %s4 = ssub.s32 1, %s2
  %s5 = scalar_select 0, %s4, %s2
  // Predicated region
  $region2: #{window_attention_gfc.3} parent=0 // pred_check
    _
  $region3: #{window_attention_gfc.3} parent=0 // pred_check_branch
    %7 = sbr.rel (0) target = $region5
  $region4: #{window_attention_gfc.3} parent=0 // pred_region
    _
  $region5: #{window_attention_gfc.3} parent=0 // pred_fallthru
    _
  %v8 = vld [vmem:[%s0] sm:$0xff]
  %v9 = vld [vmem:[%s0 + $0x8] sm:$0xff]
  %v10 = vld [vmem:[%s0 + $0x10] sm:$0xff]
  %v11 = vld [vmem:[%s0 + $0x18] sm:$0xff]
  %v12 = vld [vmem:[%s0 + $0x20] sm:$0xff]
  %v13 = vld [vmem:[%s0 + $0x28] sm:$0xff]
  %v14 = vld [vmem:[%s0 + $0x30] sm:$0xff]
  %v15 = vld [vmem:[%s0 + $0x38] sm:$0xff]
  %v16 = vld [vmem:[%s0 + $0x40] sm:$0xff]
  %v17 = vld [vmem:[%s0 + $0x48] sm:$0xff]
  %v18 = vld [vmem:[%s0 + $0x50] sm:$0xff]
  %v19 = vld [vmem:[%s0 + $0x58] sm:$0xff]
  %v20 = vld [vmem:[%s0 + $0x60] sm:$0xff]
  %v21 = vld [vmem:[%s0 + $0x68] sm:$0xff]
  %v22 = vld [vmem:[%s0 + $0x70] sm:$0xff]
  %v23 = vld [vmem:[%s0 + $0x78] sm:$0xff]
  %s24 = scalar_lea.vmem %s0, 128
  %v25 = vld [vmem:[%s24] sm:$0xff]
  %v26 = vld [vmem:[%s24 + $0x8] sm:$0xff]
  %v27 = vld [vmem:[%s24 + $0x10] sm:$0xff]
  %v28 = vld [vmem:[%s24 + $0x18] sm:$0xff]
  %v29 = vld [vmem:[%s24 + $0x20] sm:$0xff]
  %v30 = vld [vmem:[%s24 + $0x28] sm:$0xff]
  %v31 = vld [vmem:[%s24 + $0x30] sm:$0xff]
  %v32 = vld [vmem:[%s24 + $0x38] sm:$0xff]
  %v33 = vld [vmem:[%s24 + $0x40] sm:$0xff]
  %v34 = vld [vmem:[%s24 + $0x48] sm:$0xff]
  %v35 = vld [vmem:[%s24 + $0x50] sm:$0xff]
  %v36 = vld [vmem:[%s24 + $0x58] sm:$0xff]
  %v37 = vld [vmem:[%s24 + $0x60] sm:$0xff]
  %v38 = vld [vmem:[%s24 + $0x68] sm:$0xff]
  %v39 = vld [vmem:[%s24 + $0x70] sm:$0xff]
  %v40 = vld [vmem:[%s24 + $0x78] sm:$0xff]
  %s41 = scalar_lea.vmem %s0, 256
  %v42 = vld [vmem:[%s41] sm:$0xff]
  %v43 = vld [vmem:[%s41 + $0x8] sm:$0xff]
  %v44 = vld [vmem:[%s41 + $0x10] sm:$0xff]
  %v45 = vld [vmem:[%s41 + $0x18] sm:$0xff]
  %v46 = vld [vmem:[%s41 + $0x20] sm:$0xff]
  %v47 = vld [vmem:[%s41 + $0x28] sm:$0xff]
  %v48 = vld [vmem:[%s41 + $0x30] sm:$0xff]
  %v49 = vld [vmem:[%s41 + $0x38] sm:$0xff]
  %v50 = vld [vmem:[%s41 + $0x40] sm:$0xff]
  %v51 = vld [vmem:[%s41 + $0x48] sm:$0xff]
  %v52 = vld [vmem:[%s41 + $0x50] sm:$0xff]
  %v53 = vld [vmem:[%s41 + $0x58] sm:$0xff]
  %v54 = vld [vmem:[%s41 + $0x60] sm:$0xff]
  %v55 = vld [vmem:[%s41 + $0x68] sm:$0xff]
  %v56 = vld [vmem:[%s41 + $0x70] sm:$0xff]
  %v57 = vld [vmem:[%s41 + $0x78] sm:$0xff]
  %vm58 = vcmask 64512
  %v60 = vsel %vm58, %v8, 0
  %v63 = vsel %vm58, %v9, 0
  %v66 = vsel %vm58, %v25, 0
  %v69 = vsel %vm58, %v26, 0
  %71 = vmatprep.subr.mxu0 0.0
  %72 = vmatpush1.xpose.msra.mxu0 0.0
  %73 = vmatprep.subr.mxu0 0.0
  %74 = vmatpush1.xpose.msra.mxu0 0.0
  %75 = vmatprep.subr.mxu0 0.0
  %76 = vmatpush1.xpose.msra.mxu0 0.0
  %77 = vmatprep.subr.mxu0 0.0
  %78 = vmatpush1.xpose.msra.mxu0 0.0
  %79 = vmatprep.subr.mxu0 0.0
  %80 = vmatpush1.xpose.msra.mxu0 0.0
  %81 = vmatprep.subr.mxu0 0.0
  %82 = vmatpush1.xpose.msra.mxu0 0.0
  %83 = vmatprep.subr.mxu0 0.0
  %84 = vmatpush1.xpose.msra.mxu0 0.0
  %85 = vmatprep.subr.mxu0 0.0
  %86 = vmatpush1.xpose.msra.mxu0 0.0
  %87 = vmatprep.subr.mxu0 0.0
  %88 = vmatpush1.xpose.msra.mxu0 0.0
  %89 = vmatprep.subr.mxu0 0.0
  %90 = vmatpush1.xpose.msra.mxu0 0.0
  %91 = vmatprep.subr.mxu0 0.0
  %92 = vmatpush1.xpose.msra.mxu0 0.0
  %93 = vmatprep.subr.mxu0 0.0
  %94 = vmatpush1.xpose.msra.mxu0 0.0
  %95 = vmatprep.subr.mxu0 0.0
  %96 = vmatpush1.xpose.msra.mxu0 0.0
  %97 = vmatprep.subr.mxu0 0.0
  %98 = vmatpush1.xpose.msra.mxu0 0.0
  %99 = vmatprep.subr.mxu0 0.0
  %100 = vmatpush1.xpose.msra.mxu0 %v69
  %101 = vmatprep.subr.mxu0 0.0
  %102 = vmatpush1.xpose.msra.mxu0 %v66
  %103 = vmatprep.subr.mxu0 0.0
  %104 = vmatpush2.xpose.msra.mxu0 0.0
  %105 = vmatprep.subr.mxu0 0.0
  %106 = vmatpush2.xpose.msra.mxu0 0.0
  %107 = vmatprep.subr.mxu0 0.0
  %108 = vmatpush2.xpose.msra.mxu0 0.0
  %109 = vmatprep.subr.mxu0 0.0
  %110 = vmatpush2.xpose.msra.mxu0 0.0
  %111 = vmatprep.subr.mxu0 0.0
  %112 = vmatpush2.xpose.msra.mxu0 0.0
  %113 = vmatprep.subr.mxu0 0.0
  %114 = vmatpush2.xpose.msra.mxu0 0.0
  %115 = vmatprep.subr.mxu0 0.0
  %116 = vmatpush2.xpose.msra.mxu0 0.0
  %117 = vmatprep.subr.mxu0 0.0
  %118 = vmatpush2.xpose.msra.mxu0 0.0
  %119 = vmatprep.subr.mxu0 0.0
  %120 = vmatpush2.xpose.msra.mxu0 0.0
  %121 = vmatprep.subr.mxu0 0.0
  %122 = vmatpush2.xpose.msra.mxu0 0.0
  %123 = vmatprep.subr.mxu0 0.0
  %124 = vmatpush2.xpose.msra.mxu0 0.0
  %125 = vmatprep.subr.mxu0 0.0
  %126 = vmatpush2.xpose.msra.mxu0 0.0
  %127 = vmatprep.subr.mxu0 0.0
  %128 = vmatpush2.xpose.msra.mxu0 0.0
  %129 = vmatprep.subr.mxu0 0.0
  %130 = vmatpush2.xpose.msra.mxu0 0.0
  %131 = vmatprep.subr.mxu0 0.0
  %132 = vmatpush2.xpose.msra.mxu0 0.0
  %133 = vmatprep.subr.mxu0 0.0
  %134 = vmatpush2.xpose.msra.mxu0 0.0
  %135 = vmatprep.mubr.f32.mxu0 0.0
  %136 = vmatmul.mubr.f32.gmra.mxu0 %v60
  %v137 = vpop.f32.mrf.mxu0
  %v138 = vadd.f32 0.0, %v137
  %v139 = vpop.f32.mrf.mxu0
  %140 = vmatprep.mubr.f32.mxu0 0.0
  %141 = vmatmul.mubr.f32.gmra.mxu0 %v63
  %v142 = vpop.f32.mrf.mxu0
  %v143 = vadd.f32 0.0, %v142
  %v144 = vpop.f32.mrf.mxu0
  %145 = vdwg.mxu0
  %v147 = vsel %vm58, %v10, 0
  %v150 = vsel %vm58, %v11, 0
  %v153 = vsel %vm58, %v27, 0
  %v156 = vsel %vm58, %v28, 0
  %158 = vmatprep.subr.mxu0 0.0
  %159 = vmatpush1.xpose.msra.mxu0 0.0
  %160 = vmatprep.subr.mxu0 0.0
  %161 = vmatpush1.xpose.msra.mxu0 0.0
  %162 = vmatprep.subr.mxu0 0.0
  %163 = vmatpush1.xpose.msra.mxu0 0.0
  %164 = vmatprep.subr.mxu0 0.0
  %165 = vmatpush1.xpose.msra.mxu0 0.0
  %166 = vmatprep.subr.mxu0 0.0
  %167 = vmatpush1.xpose.msra.mxu0 0.0
  %168 = vmatprep.subr.mxu0 0.0
  %169 = vmatpush1.xpose.msra.mxu0 0.0
  %170 = vmatprep.subr.mxu0 0.0
  %171 = vmatpush1.xpose.msra.mxu0 0.0
  %172 = vmatprep.subr.mxu0 0.0
  %173 = vmatpush1.xpose.msra.mxu0 0.0
  %174 = vmatprep.subr.mxu0 0.0
  %175 = vmatpush1.xpose.msra.mxu0 0.0
  %176 = vmatprep.subr.mxu0 0.0
  %177 = vmatpush1.xpose.msra.mxu0 0.0
  %178 = vmatprep.subr.mxu0 0.0
  %179 = vmatpush1.xpose.msra.mxu0 0.0
  %180 = vmatprep.subr.mxu0 0.0
  %181 = vmatpush1.xpose.msra.mxu0 0.0
  %182 = vmatprep.subr.mxu0 0.0
  %183 = vmatpush1.xpose.msra.mxu0 0.0
  %184 = vmatprep.subr.mxu0 0.0
  %185 = vmatpush1.xpose.msra.mxu0 0.0
  %186 = vmatprep.subr.mxu0 0.0
  %187 = vmatpush1.xpose.msra.mxu0 %v156
  %188 = vmatprep.subr.mxu0 0.0
  %189 = vmatpush1.xpose.msra.mxu0 %v153
  %190 = vmatprep.subr.mxu0 0.0
  %191 = vmatpush2.xpose.msra.mxu0 0.0
  %192 = vmatprep.subr.mxu0 0.0
  %193 = vmatpush2.xpose.msra.mxu0 0.0
  %194 = vmatprep.subr.mxu0 0.0
  %195 = vmatpush2.xpose.msra.mxu0 0.0
  %196 = vmatprep.subr.mxu0 0.0
  %197 = vmatpush2.xpose.msra.mxu0 0.0
  %198 = vmatprep.subr.mxu0 0.0
  %199 = vmatpush2.xpose.msra.mxu0 0.0
  %200 = vmatprep.subr.mxu0 0.0
  %201 = vmatpush2.xpose.msra.mxu0 0.0
  %202 = vmatprep.subr.mxu0 0.0
  %203 = vmatpush2.xpose.msra.mxu0 0.0
  %204 = vmatprep.subr.mxu0 0.0
  %205 = vmatpush2.xpose.msra.mxu0 0.0
  %206 = vmatprep.subr.mxu0 0.0
  %207 = vmatpush2.xpose.msra.mxu0 0.0
  %208 = vmatprep.subr.mxu0 0.0
  %209 = vmatpush2.xpose.msra.mxu0 0.0
  %210 = vmatprep.subr.mxu0 0.0
  %211 = vmatpush2.xpose.msra.mxu0 0.0
  %212 = vmatprep.subr.mxu0 0.0
  %213 = vmatpush2.xpose.msra.mxu0 0.0
  %214 = vmatprep.subr.mxu0 0.0
  %215 = vmatpush2.xpose.msra.mxu0 0.0
  %216 = vmatprep.subr.mxu0 0.0
  %217 = vmatpush2.xpose.msra.mxu0 0.0
  %218 = vmatprep.subr.mxu0 0.0
  %219 = vmatpush2.xpose.msra.mxu0 0.0
  %220 = vmatprep.subr.mxu0 0.0
  %221 = vmatpush2.xpose.msra.mxu0 0.0
  %222 = vmatprep.mubr.f32.mxu0 0.0
  %223 = vmatmul.mubr.f32.gmra.mxu0 %v147
  %v224 = vpop.f32.mrf.mxu0
  %v225 = vadd.f32 0.0, %v224
  %v226 = vpop.f32.mrf.mxu0
  %227 = vmatprep.mubr.f32.mxu0 0.0
  %228 = vmatmul.mubr.f32.gmra.mxu0 %v150
  %v229 = vpop.f32.mrf.mxu0
  %v230 = vadd.f32 0.0, %v229
  %v231 = vpop.f32.mrf.mxu0
  %232 = vdwg.mxu0
  %v234 = vsel %vm58, %v12, 0
  %v237 = vsel %vm58, %v13, 0
  %v240 = vsel %vm58, %v29, 0
  %v243 = vsel %vm58, %v30, 0
  %245 = vmatprep.subr.mxu0 0.0
  %246 = vmatpush1.xpose.msra.mxu0 0.0
  %247 = vmatprep.subr.mxu0 0.0
  %248 = vmatpush1.xpose.msra.mxu0 0.0
  %249 = vmatprep.subr.mxu0 0.0
  %250 = vmatpush1.xpose.msra.mxu0 0.0
  %251 = vmatprep.subr.mxu0 0.0
  %252 = vmatpush1.xpose.msra.mxu0 0.0
  %253 = vmatprep.subr.mxu0 0.0
  %254 = vmatpush1.xpose.msra.mxu0 0.0
  %255 = vmatprep.subr.mxu0 0.0
  %256 = vmatpush1.xpose.msra.mxu0 0.0
  %257 = vmatprep.subr.mxu0 0.0
  %258 = vmatpush1.xpose.msra.mxu0 0.0
  %259 = vmatprep.subr.mxu0 0.0
  %260 = vmatpush1.xpose.msra.mxu0 0.0
  %261 = vmatprep.subr.mxu0 0.0
  %262 = vmatpush1.xpose.msra.mxu0 0.0
  %263 = vmatprep.subr.mxu0 0.0
  %264 = vmatpush1.xpose.msra.mxu0 0.0
  %265 = vmatprep.subr.mxu0 0.0
  %266 = vmatpush1.xpose.msra.mxu0 0.0
  %267 = vmatprep.subr.mxu0 0.0
  %268 = vmatpush1.xpose.msra.mxu0 0.0
  %269 = vmatprep.subr.mxu0 0.0
  %270 = vmatpush1.xpose.msra.mxu0 0.0
  %271 = vmatprep.subr.mxu0 0.0
  %272 = vmatpush1.xpose.msra.mxu0 0.0
  %273 = vmatprep.subr.mxu0 0.0
  %274 = vmatpush1.xpose.msra.mxu0 %v243
  %275 = vmatprep.subr.mxu0 0.0
  %276 = vmatpush1.xpose.msra.mxu0 %v240
  %277 = vmatprep.subr.mxu0 0.0
  %278 = vmatpush2.xpose.msra.mxu0 0.0
  %279 = vmatprep.subr.mxu0 0.0
  %280 = vmatpush2.xpose.msra.mxu0 0.0
  %281 = vmatprep.subr.mxu0 0.0
  %282 = vmatpush2.xpose.msra.mxu0 0.0
  %283 = vmatprep.subr.mxu0 0.0
  %284 = vmatpush2.xpose.msra.mxu0 0.0
  %285 = vmatprep.subr.mxu0 0.0
  %286 = vmatpush2.xpose.msra.mxu0 0.0
  %287 = vmatprep.subr.mxu0 0.0
  %288 = vmatpush2.xpose.msra.mxu0 0.0
  %289 = vmatprep.subr.mxu0 0.0
  %290 = vmatpush2.xpose.msra.mxu0 0.0
  %291 = vmatprep.subr.mxu0 0.0
  %292 = vmatpush2.xpose.msra.mxu0 0.0
  %293 = vmatprep.subr.mxu0 0.0
  %294 = vmatpush2.xpose.msra.mxu0 0.0
  %295 = vmatprep.subr.mxu0 0.0
  %296 = vmatpush2.xpose.msra.mxu0 0.0
  %297 = vmatprep.subr.mxu0 0.0
  %298 = vmatpush2.xpose.msra.mxu0 0.0
  %299 = vmatprep.subr.mxu0 0.0
  %300 = vmatpush2.xpose.msra.mxu0 0.0
  %301 = vmatprep.subr.mxu0 0.0
  %302 = vmatpush2.xpose.msra.mxu0 0.0
  %303 = vmatprep.subr.mxu0 0.0
  %304 = vmatpush2.xpose.msra.mxu0 0.0
  %305 = vmatprep.subr.mxu0 0.0
  %306 = vmatpush2.xpose.msra.mxu0 0.0
  %307 = vmatprep.subr.mxu0 0.0
  %308 = vmatpush2.xpose.msra.mxu0 0.0
  %309 = vmatprep.mubr.f32.mxu0 0.0
  %310 = vmatmul.mubr.f32.gmra.mxu0 %v234
  %v311 = vpop.f32.mrf.mxu0
  %v312 = vadd.f32 0.0, %v311
  %v313 = vpop.f32.mrf.mxu0
  %314 = vmatprep.mubr.f32.mxu0 0.0
  %315 = vmatmul.mubr.f32.gmra.mxu0 %v237
  %v316 = vpop.f32.mrf.mxu0
  %v317 = vadd.f32 0.0, %v316
  %v318 = vpop.f32.mrf.mxu0
  %319 = vdwg.mxu0
  %v321 = vsel %vm58, %v14, 0
  %v324 = vsel %vm58, %v15, 0
  %v327 = vsel %vm58, %v31, 0
  %v330 = vsel %vm58, %v32, 0
  %332 = vmatprep.subr.mxu0 0.0
  %333 = vmatpush1.xpose.msra.mxu0 0.0
  %334 = vmatprep.subr.mxu0 0.0
  %335 = vmatpush1.xpose.msra.mxu0 0.0
  %336 = vmatprep.subr.mxu0 0.0
  %337 = vmatpush1.xpose.msra.mxu0 0.0
  %338 = vmatprep.subr.mxu0 0.0
  %339 = vmatpush1.xpose.msra.mxu0 0.0
  %340 = vmatprep.subr.mxu0 0.0
  %341 = vmatpush1.xpose.msra.mxu0 0.0
  %342 = vmatprep.subr.mxu0 0.0
  %343 = vmatpush1.xpose.msra.mxu0 0.0
  %344 = vmatprep.subr.mxu0 0.0
  %345 = vmatpush1.xpose.msra.mxu0 0.0
  %346 = vmatprep.subr.mxu0 0.0
  %347 = vmatpush1.xpose.msra.mxu0 0.0
  %348 = vmatprep.subr.mxu0 0.0
  %349 = vmatpush1.xpose.msra.mxu0 0.0
  %350 = vmatprep.subr.mxu0 0.0
  %351 = vmatpush1.xpose.msra.mxu0 0.0
  %352 = vmatprep.subr.mxu0 0.0
  %353 = vmatpush1.xpose.msra.mxu0 0.0
  %354 = vmatprep.subr.mxu0 0.0
  %355 = vmatpush1.xpose.msra.mxu0 0.0
  %356 = vmatprep.subr.mxu0 0.0
  %357 = vmatpush1.xpose.msra.mxu0 0.0
  %358 = vmatprep.subr.mxu0 0.0
  %359 = vmatpush1.xpose.msra.mxu0 0.0
  %360 = vmatprep.subr.mxu0 0.0
  %361 = vmatpush1.xpose.msra.mxu0 %v330
  %362 = vmatprep.subr.mxu0 0.0
  %363 = vmatpush1.xpose.msra.mxu0 %v327
  %364 = vmatprep.subr.mxu0 0.0
  %365 = vmatpush2.xpose.msra.mxu0 0.0
  %366 = vmatprep.subr.mxu0 0.0
  %367 = vmatpush2.xpose.msra.mxu0 0.0
  %368 = vmatprep.subr.mxu0 0.0
  %369 = vmatpush2.xpose.msra.mxu0 0.0
  %370 = vmatprep.subr.mxu0 0.0
  %371 = vmatpush2.xpose.msra.mxu0 0.0
  %372 = vmatprep.subr.mxu0 0.0
  %373 = vmatpush2.xpose.msra.mxu0 0.0
  %374 = vmatprep.subr.mxu0 0.0
  %375 = vmatpush2.xpose.msra.mxu0 0.0
  %376 = vmatprep.subr.mxu0 0.0
  %377 = vmatpush2.xpose.msra.mxu0 0.0
  %378 = vmatprep.subr.mxu0 0.0
  %379 = vmatpush2.xpose.msra.mxu0 0.0
  %380 = vmatprep.subr.mxu0 0.0
  %381 = vmatpush2.xpose.msra.mxu0 0.0
  %382 = vmatprep.subr.mxu0 0.0
  %383 = vmatpush2.xpose.msra.mxu0 0.0
  %384 = vmatprep.subr.mxu0 0.0
  %385 = vmatpush2.xpose.msra.mxu0 0.0
  %386 = vmatprep.subr.mxu0 0.0
  %387 = vmatpush2.xpose.msra.mxu0 0.0
  %388 = vmatprep.subr.mxu0 0.0
  %389 = vmatpush2.xpose.msra.mxu0 0.0
  %390 = vmatprep.subr.mxu0 0.0
  %391 = vmatpush2.xpose.msra.mxu0 0.0
  %392 = vmatprep.subr.mxu0 0.0
  %393 = vmatpush2.xpose.msra.mxu0 0.0
  %394 = vmatprep.subr.mxu0 0.0
  %395 = vmatpush2.xpose.msra.mxu0 0.0
  %396 = vmatprep.mubr.f32.mxu0 0.0
  %397 = vmatmul.mubr.f32.gmra.mxu0 %v321
  %v398 = vpop.f32.mrf.mxu0
  %v399 = vadd.f32 0.0, %v398
  %v400 = vpop.f32.mrf.mxu0
  %401 = vmatprep.mubr.f32.mxu0 0.0
  %402 = vmatmul.mubr.f32.gmra.mxu0 %v324
  %v403 = vpop.f32.mrf.mxu0
  %v404 = vadd.f32 0.0, %v403
  %v405 = vpop.f32.mrf.mxu0
  %406 = vdwg.mxu0
  %v408 = vsel %vm58, %v16, 0
  %v411 = vsel %vm58, %v17, 0
  %v414 = vsel %vm58, %v33, 0
  %v417 = vsel %vm58, %v34, 0
  %419 = vmatprep.subr.mxu0 0.0
  %420 = vmatpush1.xpose.msra.mxu0 0.0
  %421 = vmatprep.subr.mxu0 0.0
  %422 = vmatpush1.xpose.msra.mxu0 0.0
  %423 = vmatprep.subr.mxu0 0.0
  %424 = vmatpush1.xpose.msra.mxu0 0.0
  %425 = vmatprep.subr.mxu0 0.0
  %426 = vmatpush1.xpose.msra.mxu0 0.0
  %427 = vmatprep.subr.mxu0 0.0
  %428 = vmatpush1.xpose.msra.mxu0 0.0
  %429 = vmatprep.subr.mxu0 0.0
  %430 = vmatpush1.xpose.msra.mxu0 0.0
  %431 = vmatprep.subr.mxu0 0.0
  %432 = vmatpush1.xpose.msra.mxu0 0.0
  %433 = vmatprep.subr.mxu0 0.0
  %434 = vmatpush1.xpose.msra.mxu0 0.0
  %435 = vmatprep.subr.mxu0 0.0
  %436 = vmatpush1.xpose.msra.mxu0 0.0
  %437 = vmatprep.subr.mxu0 0.0
  %438 = vmatpush1.xpose.msra.mxu0 0.0
  %439 = vmatprep.subr.mxu0 0.0
  %440 = vmatpush1.xpose.msra.mxu0 0.0
  %441 = vmatprep.subr.mxu0 0.0
  %442 = vmatpush1.xpose.msra.mxu0 0.0
  %443 = vmatprep.subr.mxu0 0.0
  %444 = vmatpush1.xpose.msra.mxu0 0.0
  %445 = vmatprep.subr.mxu0 0.0
  %446 = vmatpush1.xpose.msra.mxu0 0.0
  %447 = vmatprep.subr.mxu0 0.0
  %448 = vmatpush1.xpose.msra.mxu0 %v417
  %449 = vmatprep.subr.mxu0 0.0
  %450 = vmatpush1.xpose.msra.mxu0 %v414
  %451 = vmatprep.subr.mxu0 0.0
  %452 = vmatpush2.xpose.msra.mxu0 0.0
  %453 = vmatprep.subr.mxu0 0.0
  %454 = vmatpush2.xpose.msra.mxu0 0.0
  %455 = vmatprep.subr.mxu0 0.0
  %456 = vmatpush2.xpose.msra.mxu0 0.0
  %457 = vmatprep.subr.mxu0 0.0
  %458 = vmatpush2.xpose.msra.mxu0 0.0
  %459 = vmatprep.subr.mxu0 0.0
  %460 = vmatpush2.xpose.msra.mxu0 0.0
  %461 = vmatprep.subr.mxu0 0.0
  %462 = vmatpush2.xpose.msra.mxu0 0.0
  %463 = vmatprep.subr.mxu0 0.0
  %464 = vmatpush2.xpose.msra.mxu0 0.0
  %465 = vmatprep.subr.mxu0 0.0
  %466 = vmatpush2.xpose.msra.mxu0 0.0
  %467 = vmatprep.subr.mxu0 0.0
  %468 = vmatpush2.xpose.msra.mxu0 0.0
  %469 = vmatprep.subr.mxu0 0.0
  %470 = vmatpush2.xpose.msra.mxu0 0.0
  %471 = vmatprep.subr.mxu0 0.0
  %472 = vmatpush2.xpose.msra.mxu0 0.0
  %473 = vmatprep.subr.mxu0 0.0
  %474 = vmatpush2.xpose.msra.mxu0 0.0
  %475 = vmatprep.subr.mxu0 0.0
  %476 = vmatpush2.xpose.msra.mxu0 0.0
  %477 = vmatprep.subr.mxu0 0.0
  %478 = vmatpush2.xpose.msra.mxu0 0.0
  %479 = vmatprep.subr.mxu0 0.0
  %480 = vmatpush2.xpose.msra.mxu0 0.0
  %481 = vmatprep.subr.mxu0 0.0
  %482 = vmatpush2.xpose.msra.mxu0 0.0
  %483 = vmatprep.mubr.f32.mxu0 0.0
  %484 = vmatmul.mubr.f32.gmra.mxu0 %v408
  %v485 = vpop.f32.mrf.mxu0
  %v486 = vadd.f32 0.0, %v485
  %v487 = vpop.f32.mrf.mxu0
  %488 = vmatprep.mubr.f32.mxu0 0.0
  %489 = vmatmul.mubr.f32.gmra.mxu0 %v411
  %v490 = vpop.f32.mrf.mxu0
  %v491 = vadd.f32 0.0, %v490
  %v492 = vpop.f32.mrf.mxu0
  %493 = vdwg.mxu0
  %v495 = vsel %vm58, %v18, 0
  %v498 = vsel %vm58, %v19, 0
  %v501 = vsel %vm58, %v35, 0
  %v504 = vsel %vm58, %v36, 0
  %506 = vmatprep.subr.mxu0 0.0
  %507 = vmatpush1.xpose.msra.mxu0 0.0
  %508 = vmatprep.subr.mxu0 0.0
  %509 = vmatpush1.xpose.msra.mxu0 0.0
  %510 = vmatprep.subr.mxu0 0.0
  %511 = vmatpush1.xpose.msra.mxu0 0.0
  %512 = vmatprep.subr.mxu0 0.0
  %513 = vmatpush1.xpose.msra.mxu0 0.0
  %514 = vmatprep.subr.mxu0 0.0
  %515 = vmatpush1.xpose.msra.mxu0 0.0
  %516 = vmatprep.subr.mxu0 0.0
  %517 = vmatpush1.xpose.msra.mxu0 0.0
  %518 = vmatprep.subr.mxu0 0.0
  %519 = vmatpush1.xpose.msra.mxu0 0.0
  %520 = vmatprep.subr.mxu0 0.0
  %521 = vmatpush1.xpose.msra.mxu0 0.0
  %522 = vmatprep.subr.mxu0 0.0
  %523 = vmatpush1.xpose.msra.mxu0 0.0
  %524 = vmatprep.subr.mxu0 0.0
  %525 = vmatpush1.xpose.msra.mxu0 0.0
  %526 = vmatprep.subr.mxu0 0.0
  %527 = vmatpush1.xpose.msra.mxu0 0.0
  %528 = vmatprep.subr.mxu0 0.0
  %529 = vmatpush1.xpose.msra.mxu0 0.0
  %530 = vmatprep.subr.mxu0 0.0
  %531 = vmatpush1.xpose.msra.mxu0 0.0
  %532 = vmatprep.subr.mxu0 0.0
  %533 = vmatpush1.xpose.msra.mxu0 0.0
  %534 = vmatprep.subr.mxu0 0.0
  %535 = vmatpush1.xpose.msra.mxu0 %v504
  %536 = vmatprep.subr.mxu0 0.0
  %537 = vmatpush1.xpose.msra.mxu0 %v501
  %538 = vmatprep.subr.mxu0 0.0
  %539 = vmatpush2.xpose.msra.mxu0 0.0
  %540 = vmatprep.subr.mxu0 0.0
  %541 = vmatpush2.xpose.msra.mxu0 0.0
  %542 = vmatprep.subr.mxu0 0.0
  %543 = vmatpush2.xpose.msra.mxu0 0.0
  %544 = vmatprep.subr.mxu0 0.0
  %545 = vmatpush2.xpose.msra.mxu0 0.0
  %546 = vmatprep.subr.mxu0 0.0
  %547 = vmatpush2.xpose.msra.mxu0 0.0
  %548 = vmatprep.subr.mxu0 0.0
  %549 = vmatpush2.xpose.msra.mxu0 0.0
  %550 = vmatprep.subr.mxu0 0.0
  %551 = vmatpush2.xpose.msra.mxu0 0.0
  %552 = vmatprep.subr.mxu0 0.0
  %553 = vmatpush2.xpose.msra.mxu0 0.0
  %554 = vmatprep.subr.mxu0 0.0
  %555 = vmatpush2.xpose.msra.mxu0 0.0
  %556 = vmatprep.subr.mxu0 0.0
  %557 = vmatpush2.xpose.msra.mxu0 0.0
  %558 = vmatprep.subr.mxu0 0.0
  %559 = vmatpush2.xpose.msra.mxu0 0.0
  %560 = vmatprep.subr.mxu0 0.0
  %561 = vmatpush2.xpose.msra.mxu0 0.0
  %562 = vmatprep.subr.mxu0 0.0
  %563 = vmatpush2.xpose.msra.mxu0 0.0
  %564 = vmatprep.subr.mxu0 0.0
  %565 = vmatpush2.xpose.msra.mxu0 0.0
  %566 = vmatprep.subr.mxu0 0.0
  %567 = vmatpush2.xpose.msra.mxu0 0.0
  %568 = vmatprep.subr.mxu0 0.0
  %569 = vmatpush2.xpose.msra.mxu0 0.0
  %570 = vmatprep.mubr.f32.mxu0 0.0
  %571 = vmatmul.mubr.f32.gmra.mxu0 %v495
  %v572 = vpop.f32.mrf.mxu0
  %v573 = vadd.f32 0.0, %v572
  %v574 = vpop.f32.mrf.mxu0
  %575 = vmatprep.mubr.f32.mxu0 0.0
  %576 = vmatmul.mubr.f32.gmra.mxu0 %v498
  %v577 = vpop.f32.mrf.mxu0
  %v578 = vadd.f32 0.0, %v577
  %v579 = vpop.f32.mrf.mxu0
  %580 = vdwg.mxu0
  %v582 = vsel %vm58, %v20, 0
  %v585 = vsel %vm58, %v21, 0
  %v588 = vsel %vm58, %v37, 0
  %v591 = vsel %vm58, %v38, 0
  %593 = vmatprep.subr.mxu0 0.0
  %594 = vmatpush1.xpose.msra.mxu0 0.0
  %595 = vmatprep.subr.mxu0 0.0
  %596 = vmatpush1.xpose.msra.mxu0 0.0
  %597 = vmatprep.subr.mxu0 0.0
  %598 = vmatpush1.xpose.msra.mxu0 0.0
  %599 = vmatprep.subr.mxu0 0.0
  %600 = vmatpush1.xpose.msra.mxu0 0.0
  %601 = vmatprep.subr.mxu0 0.0
  %602 = vmatpush1.xpose.msra.mxu0 0.0
  %603 = vmatprep.subr.mxu0 0.0
  %604 = vmatpush1.xpose.msra.mxu0 0.0
  %605 = vmatprep.subr.mxu0 0.0
  %606 = vmatpush1.xpose.msra.mxu0 0.0
  %607 = vmatprep.subr.mxu0 0.0
  %608 = vmatpush1.xpose.msra.mxu0 0.0
  %609 = vmatprep.subr.mxu0 0.0
  %610 = vmatpush1.xpose.msra.mxu0 0.0
  %611 = vmatprep.subr.mxu0 0.0
  %612 = vmatpush1.xpose.msra.mxu0 0.0
  %613 = vmatprep.subr.mxu0 0.0
  %614 = vmatpush1.xpose.msra.mxu0 0.0
  %615 = vmatprep.subr.mxu0 0.0
  %616 = vmatpush1.xpose.msra.mxu0 0.0
  %617 = vmatprep.subr.mxu0 0.0
  %618 = vmatpush1.xpose.msra.mxu0 0.0
  %619 = vmatprep.subr.mxu0 0.0
  %620 = vmatpush1.xpose.msra.mxu0 0.0
  %621 = vmatprep.subr.mxu0 0.0
  %622 = vmatpush1.xpose.msra.mxu0 %v591
  %623 = vmatprep.subr.mxu0 0.0
  %624 = vmatpush1.xpose.msra.mxu0 %v588
  %625 = vmatprep.subr.mxu0 0.0
  %626 = vmatpush2.xpose.msra.mxu0 0.0
  %627 = vmatprep.subr.mxu0 0.0
  %628 = vmatpush2.xpose.msra.mxu0 0.0
  %629 = vmatprep.subr.mxu0 0.0
  %630 = vmatpush2.xpose.msra.mxu0 0.0
  %631 = vmatprep.subr.mxu0 0.0
  %632 = vmatpush2.xpose.msra.mxu0 0.0
  %633 = vmatprep.subr.mxu0 0.0
  %634 = vmatpush2.xpose.msra.mxu0 0.0
  %635 = vmatprep.subr.mxu0 0.0
  %636 = vmatpush2.xpose.msra.mxu0 0.0
  %637 = vmatprep.subr.mxu0 0.0
  %638 = vmatpush2.xpose.msra.mxu0 0.0
  %639 = vmatprep.subr.mxu0 0.0
  %640 = vmatpush2.xpose.msra.mxu0 0.0
  %641 = vmatprep.subr.mxu0 0.0
  %642 = vmatpush2.xpose.msra.mxu0 0.0
  %643 = vmatprep.subr.mxu0 0.0
  %644 = vmatpush2.xpose.msra.mxu0 0.0
  %645 = vmatprep.subr.mxu0 0.0
  %646 = vmatpush2.xpose.msra.mxu0 0.0
  %647 = vmatprep.subr.mxu0 0.0
  %648 = vmatpush2.xpose.msra.mxu0 0.0
  %649 = vmatprep.subr.mxu0 0.0
  %650 = vmatpush2.xpose.msra.mxu0 0.0
  %651 = vmatprep.subr.mxu0 0.0
  %652 = vmatpush2.xpose.msra.mxu0 0.0
  %653 = vmatprep.subr.mxu0 0.0
  %654 = vmatpush2.xpose.msra.mxu0 0.0
  %655 = vmatprep.subr.mxu0 0.0
  %656 = vmatpush2.xpose.msra.mxu0 0.0
  %657 = vmatprep.mubr.f32.mxu0 0.0
  %658 = vmatmul.mubr.f32.gmra.mxu0 %v582
  %v659 = vpop.f32.mrf.mxu0
  %v660 = vadd.f32 0.0, %v659
  %v661 = vpop.f32.mrf.mxu0
  %662 = vmatprep.mubr.f32.mxu0 0.0
  %663 = vmatmul.mubr.f32.gmra.mxu0 %v585
  %v664 = vpop.f32.mrf.mxu0
  %v665 = vadd.f32 0.0, %v664
  %v666 = vpop.f32.mrf.mxu0
  %667 = vdwg.mxu0
  %v669 = vsel %vm58, %v22, 0
  %v672 = vsel %vm58, %v23, 0
  %v675 = vsel %vm58, %v39, 0
  %v678 = vsel %vm58, %v40, 0
  %680 = vmatprep.subr.mxu0 0.0
  %681 = vmatpush1.xpose.msra.mxu0 0.0
  %682 = vmatprep.subr.mxu0 0.0
  %683 = vmatpush1.xpose.msra.mxu0 0.0
  %684 = vmatprep.subr.mxu0 0.0
  %685 = vmatpush1.xpose.msra.mxu0 0.0
  %686 = vmatprep.subr.mxu0 0.0
  %687 = vmatpush1.xpose.msra.mxu0 0.0
  %688 = vmatprep.subr.mxu0 0.0
  %689 = vmatpush1.xpose.msra.mxu0 0.0
  %690 = vmatprep.subr.mxu0 0.0
  %691 = vmatpush1.xpose.msra.mxu0 0.0
  %692 = vmatprep.subr.mxu0 0.0
  %693 = vmatpush1.xpose.msra.mxu0 0.0
  %694 = vmatprep.subr.mxu0 0.0
  %695 = vmatpush1.xpose.msra.mxu0 0.0
  %696 = vmatprep.subr.mxu0 0.0
  %697 = vmatpush1.xpose.msra.mxu0 0.0
  %698 = vmatprep.subr.mxu0 0.0
  %699 = vmatpush1.xpose.msra.mxu0 0.0
  %700 = vmatprep.subr.mxu0 0.0
  %701 = vmatpush1.xpose.msra.mxu0 0.0
  %702 = vmatprep.subr.mxu0 0.0
  %703 = vmatpush1.xpose.msra.mxu0 0.0
  %704 = vmatprep.subr.mxu0 0.0
  %705 = vmatpush1.xpose.msra.mxu0 0.0
  %706 = vmatprep.subr.mxu0 0.0
  %707 = vmatpush1.xpose.msra.mxu0 0.0
  %708 = vmatprep.subr.mxu0 0.0
  %709 = vmatpush1.xpose.msra.mxu0 %v678
  %710 = vmatprep.subr.mxu0 0.0
  %711 = vmatpush1.xpose.msra.mxu0 %v675
  %712 = vmatprep.subr.mxu0 0.0
  %713 = vmatpush2.xpose.msra.mxu0 0.0
  %714 = vmatprep.subr.mxu0 0.0
  %715 = vmatpush2.xpose.msra.mxu0 0.0
  %716 = vmatprep.subr.mxu0 0.0
  %717 = vmatpush2.xpose.msra.mxu0 0.0
  %718 = vmatprep.subr.mxu0 0.0
  %719 = vmatpush2.xpose.msra.mxu0 0.0
  %720 = vmatprep.subr.mxu0 0.0
  %721 = vmatpush2.xpose.msra.mxu0 0.0
  %722 = vmatprep.subr.mxu0 0.0
  %723 = vmatpush2.xpose.msra.mxu0 0.0
  %724 = vmatprep.subr.mxu0 0.0
  %725 = vmatpush2.xpose.msra.mxu0 0.0
  %726 = vmatprep.subr.mxu0 0.0
  %727 = vmatpush2.xpose.msra.mxu0 0.0
  %728 = vmatprep.subr.mxu0 0.0
  %729 = vmatpush2.xpose.msra.mxu0 0.0
  %730 = vmatprep.subr.mxu0 0.0
  %731 = vmatpush2.xpose.msra.mxu0 0.0
  %732 = vmatprep.subr.mxu0 0.0
  %733 = vmatpush2.xpose.msra.mxu0 0.0
  %734 = vmatprep.subr.mxu0 0.0
  %735 = vmatpush2.xpose.msra.mxu0 0.0
  %736 = vmatprep.subr.mxu0 0.0
  %737 = vmatpush2.xpose.msra.mxu0 0.0
  %738 = vmatprep.subr.mxu0 0.0
  %739 = vmatpush2.xpose.msra.mxu0 0.0
  %740 = vmatprep.subr.mxu0 0.0
  %741 = vmatpush2.xpose.msra.mxu0 0.0
  %742 = vmatprep.subr.mxu0 0.0
  %743 = vmatpush2.xpose.msra.mxu0 0.0
  %744 = vmatprep.mubr.f32.mxu0 0.0
  %745 = vmatmul.mubr.f32.gmra.mxu0 %v669
  %v746 = vpop.f32.mrf.mxu0
  %v747 = vadd.f32 0.0, %v746
  %v748 = vpop.f32.mrf.mxu0
  %749 = vmatprep.mubr.f32.mxu0 0.0
  %750 = vmatmul.mubr.f32.gmra.mxu0 %v672
  %v751 = vpop.f32.mrf.mxu0
  %v752 = vadd.f32 0.0, %v751
  %v753 = vpop.f32.mrf.mxu0
  %754 = vdwg.mxu0
  %vm755 = vcmask 130048
  %v756 = vsel %vm755, %v138, -inf
  %757 = vmax.xlane.f32.xlu0 %v756
  %v758 = vpop.xlane.xlu0 %757
  %v759 = vsel %vm755, %v143, -inf
  %760 = vmax.xlane.f32.xlu0 %v759
  %v761 = vpop.xlane.xlu0 %760
  %v762 = vsel %vm755, %v225, -inf
  %763 = vmax.xlane.f32.xlu0 %v762
  %v764 = vpop.xlane.xlu0 %763
  %v765 = vsel %vm755, %v230, -inf
  %766 = vmax.xlane.f32.xlu0 %v765
  %v767 = vpop.xlane.xlu0 %766
  %v768 = vsel %vm755, %v312, -inf
  %769 = vmax.xlane.f32.xlu0 %v768
  %v770 = vpop.xlane.xlu0 %769
  %v771 = vsel %vm755, %v317, -inf
  %772 = vmax.xlane.f32.xlu0 %v771
  %v773 = vpop.xlane.xlu0 %772
  %v774 = vsel %vm755, %v399, -inf
  %775 = vmax.xlane.f32.xlu0 %v774
  %v776 = vpop.xlane.xlu0 %775
  %v777 = vsel %vm755, %v404, -inf
  %778 = vmax.xlane.f32.xlu0 %v777
  %v779 = vpop.xlane.xlu0 %778
  %v780 = vsel %vm755, %v486, -inf
  %781 = vmax.xlane.f32.xlu0 %v780
  %v782 = vpop.xlane.xlu0 %781
  %v783 = vsel %vm755, %v491, -inf
  %784 = vmax.xlane.f32.xlu0 %v783
  %v785 = vpop.xlane.xlu0 %784
  %v786 = vsel %vm755, %v573, -inf
  %787 = vmax.xlane.f32.xlu0 %v786
  %v788 = vpop.xlane.xlu0 %787
  %v789 = vsel %vm755, %v578, -inf
  %790 = vmax.xlane.f32.xlu0 %v789
  %v791 = vpop.xlane.xlu0 %790
  %v792 = vsel %vm755, %v660, -inf
  %793 = vmax.xlane.f32.xlu0 %v792
  %v794 = vpop.xlane.xlu0 %793
  %v795 = vsel %vm755, %v665, -inf
  %796 = vmax.xlane.f32.xlu0 %v795
  %v797 = vpop.xlane.xlu0 %796
  %v798 = vsel %vm755, %v747, -inf
  %799 = vmax.xlane.f32.xlu0 %v798
  %v800 = vpop.xlane.xlu0 %799
  %v801 = vsel %vm755, %v752, -inf
  %802 = vmax.xlane.f32.xlu0 %v801
  %v803 = vpop.xlane.xlu0 %802
  %v804 = vsub.f32 %v138, %v758
  %v805 = vsub.f32 %v143, %v761
  %v806 = vsub.f32 %v225, %v764
  %v807 = vsub.f32 %v230, %v767
  %v808 = vsub.f32 %v312, %v770
  %v809 = vsub.f32 %v317, %v773
  %v810 = vsub.f32 %v399, %v776
  %v811 = vsub.f32 %v404, %v779
  %v812 = vsub.f32 %v486, %v782
  %v813 = vsub.f32 %v491, %v785
  %v814 = vsub.f32 %v573, %v788
  %v815 = vsub.f32 %v578, %v791
  %v816 = vsub.f32 %v660, %v794
  %v817 = vsub.f32 %v665, %v797
  %v818 = vsub.f32 %v747, %v800
  %v819 = vsub.f32 %v752, %v803
  %v820 = vmul.f32 %v804, 1.442695
  %v821 = vpow.pop %v820
  %v822 = vmul.f32 %v805, 1.442695
  %v823 = vpow.pop %v822
  %v824 = vmul.f32 %v806, 1.442695
  %v825 = vpow.pop %v824
  %v826 = vmul.f32 %v807, 1.442695
  %v827 = vpow.pop %v826
  %v828 = vmul.f32 %v808, 1.442695
  %v829 = vpow.pop %v828
  %v830 = vmul.f32 %v809, 1.442695
  %v831 = vpow.pop %v830
  %v832 = vmul.f32 %v810, 1.442695
  %v833 = vpow.pop %v832
  %v834 = vmul.f32 %v811, 1.442695
  %v835 = vpow.pop %v834
  %v836 = vmul.f32 %v812, 1.442695
  %v837 = vpow.pop %v836
  %v838 = vmul.f32 %v813, 1.442695
  %v839 = vpow.pop %v838
  %v840 = vmul.f32 %v814, 1.442695
  %v841 = vpow.pop %v840
  %v842 = vmul.f32 %v815, 1.442695
  %v843 = vpow.pop %v842
  %v844 = vmul.f32 %v816, 1.442695
  %v845 = vpow.pop %v844
  %v846 = vmul.f32 %v817, 1.442695
  %v847 = vpow.pop %v846
  %v848 = vmul.f32 %v818, 1.442695
  %v849 = vpow.pop %v848
  %v850 = vmul.f32 %v819, 1.442695
  %v851 = vpow.pop %v850
  %v852 = vsel %vm755, %v821, 0.0
  %853 = vadd.xlane.f32.xlu0 %v852
  %v854 = vpop.xlane.xlu0 %853
  %v855 = vsel %vm755, %v823, 0.0
  %856 = vadd.xlane.f32.xlu0 %v855
  %v857 = vpop.xlane.xlu0 %856
  %v858 = vsel %vm755, %v825, 0.0
  %859 = vadd.xlane.f32.xlu0 %v858
  %v860 = vpop.xlane.xlu0 %859
  %v861 = vsel %vm755, %v827, 0.0
  %862 = vadd.xlane.f32.xlu0 %v861
  %v863 = vpop.xlane.xlu0 %862
  %v864 = vsel %vm755, %v829, 0.0
  %865 = vadd.xlane.f32.xlu0 %v864
  %v866 = vpop.xlane.xlu0 %865
  %v867 = vsel %vm755, %v831, 0.0
  %868 = vadd.xlane.f32.xlu0 %v867
  %v869 = vpop.xlane.xlu0 %868
  %v870 = vsel %vm755, %v833, 0.0
  %871 = vadd.xlane.f32.xlu0 %v870
  %v872 = vpop.xlane.xlu0 %871
  %v873 = vsel %vm755, %v835, 0.0
  %874 = vadd.xlane.f32.xlu0 %v873
  %v875 = vpop.xlane.xlu0 %874
  %v876 = vsel %vm755, %v837, 0.0
  %877 = vadd.xlane.f32.xlu0 %v876
  %v878 = vpop.xlane.xlu0 %877
  %v879 = vsel %vm755, %v839, 0.0
  %880 = vadd.xlane.f32.xlu0 %v879
  %v881 = vpop.xlane.xlu0 %880
  %v882 = vsel %vm755, %v841, 0.0
  %883 = vadd.xlane.f32.xlu0 %v882
  %v884 = vpop.xlane.xlu0 %883
  %v885 = vsel %vm755, %v843, 0.0
  %886 = vadd.xlane.f32.xlu0 %v885
  %v887 = vpop.xlane.xlu0 %886
  %v888 = vsel %vm755, %v845, 0.0
  %889 = vadd.xlane.f32.xlu0 %v888
  %v890 = vpop.xlane.xlu0 %889
  %v891 = vsel %vm755, %v847, 0.0
  %892 = vadd.xlane.f32.xlu0 %v891
  %v893 = vpop.xlane.xlu0 %892
  %v894 = vsel %vm755, %v849, 0.0
  %895 = vadd.xlane.f32.xlu0 %v894
  %v896 = vpop.xlane.xlu0 %895
  %v897 = vsel %vm755, %v851, 0.0
  %898 = vadd.xlane.f32.xlu0 %v897
  %v899 = vpop.xlane.xlu0 %898
  %v901 = vsel %vm755, %v821, 0
  %v904 = vsel %vm755, %v823, 0
  %906 = vmatprep.subr.mxu0 0.0
  %907 = vmatpush1.msra.mxu0 0.0
  %908 = vmatprep.subr.mxu0 0.0
  %909 = vmatpush1.msra.mxu0 0.0
  %910 = vmatprep.subr.mxu0 0.0
  %911 = vmatpush1.msra.mxu0 0.0
  %912 = vmatprep.subr.mxu0 0.0
  %913 = vmatpush1.msra.mxu0 0.0
  %914 = vmatprep.subr.mxu0 0.0
  %915 = vmatpush1.msra.mxu0 0.0
  %916 = vmatprep.subr.mxu0 0.0
  %917 = vmatpush1.msra.mxu0 0.0
  %918 = vmatprep.subr.mxu0 0.0
  %919 = vmatpush1.msra.mxu0 0.0
  %920 = vmatprep.subr.mxu0 0.0
  %921 = vmatpush1.msra.mxu0 0.0
  %922 = vmatprep.subr.mxu0 0.0
  %923 = vmatpush1.msra.mxu0 0.0
  %924 = vmatprep.subr.mxu0 0.0
  %925 = vmatpush1.msra.mxu0 0.0
  %926 = vmatprep.subr.mxu0 0.0
  %927 = vmatpush1.msra.mxu0 0.0
  %928 = vmatprep.subr.mxu0 0.0
  %929 = vmatpush1.msra.mxu0 0.0
  %930 = vmatprep.subr.mxu0 0.0
  %931 = vmatpush1.msra.mxu0 0.0
  %932 = vmatprep.subr.mxu0 0.0
  %933 = vmatpush1.msra.mxu0 0.0
  %934 = vmatprep.subr.mxu0 0.0
  %935 = vmatpush1.msra.mxu0 %v43
  %936 = vmatprep.subr.mxu0 0.0
  %937 = vmatpush1.msra.mxu0 %v42
  %938 = vmatprep.subr.mxu0 0.0
  %939 = vmatpush2.msra.mxu0 0.0
  %940 = vmatprep.subr.mxu0 0.0
  %941 = vmatpush2.msra.mxu0 0.0
  %942 = vmatprep.subr.mxu0 0.0
  %943 = vmatpush2.msra.mxu0 0.0
  %944 = vmatprep.subr.mxu0 0.0
  %945 = vmatpush2.msra.mxu0 0.0
  %946 = vmatprep.subr.mxu0 0.0
  %947 = vmatpush2.msra.mxu0 0.0
  %948 = vmatprep.subr.mxu0 0.0
  %949 = vmatpush2.msra.mxu0 0.0
  %950 = vmatprep.subr.mxu0 0.0
  %951 = vmatpush2.msra.mxu0 0.0
  %952 = vmatprep.subr.mxu0 0.0
  %953 = vmatpush2.msra.mxu0 0.0
  %954 = vmatprep.subr.mxu0 0.0
  %955 = vmatpush2.msra.mxu0 0.0
  %956 = vmatprep.subr.mxu0 0.0
  %957 = vmatpush2.msra.mxu0 0.0
  %958 = vmatprep.subr.mxu0 0.0
  %959 = vmatpush2.msra.mxu0 0.0
  %960 = vmatprep.subr.mxu0 0.0
  %961 = vmatpush2.msra.mxu0 0.0
  %962 = vmatprep.subr.mxu0 0.0
  %963 = vmatpush2.msra.mxu0 0.0
  %964 = vmatprep.subr.mxu0 0.0
  %965 = vmatpush2.msra.mxu0 0.0
  %966 = vmatprep.subr.mxu0 0.0
  %967 = vmatpush2.msra.mxu0 0.0
  %968 = vmatprep.subr.mxu0 0.0
  %969 = vmatpush2.msra.mxu0 0.0
  %970 = vmatprep.mubr.f32.mxu0 0.0
  %971 = vmatmul.mubr.f32.gmra.mxu0 %v901
  %v972 = vpop.f32.mrf.mxu0
  %v973 = vadd.f32 0.0, %v972
  %v974 = vpop.f32.mrf.mxu0
  %975 = vmatprep.mubr.f32.mxu0 0.0
  %976 = vmatmul.mubr.f32.gmra.mxu0 %v904
  %v977 = vpop.f32.mrf.mxu0
  %v978 = vadd.f32 0.0, %v977
  %v979 = vpop.f32.mrf.mxu0
  %980 = vdwg.mxu0
  %v982 = vsel %vm755, %v825, 0
  %v985 = vsel %vm755, %v827, 0
  %987 = vmatprep.subr.mxu0 0.0
  %988 = vmatpush1.msra.mxu0 0.0
  %989 = vmatprep.subr.mxu0 0.0
  %990 = vmatpush1.msra.mxu0 0.0
  %991 = vmatprep.subr.mxu0 0.0
  %992 = vmatpush1.msra.mxu0 0.0
  %993 = vmatprep.subr.mxu0 0.0
  %994 = vmatpush1.msra.mxu0 0.0
  %995 = vmatprep.subr.mxu0 0.0
  %996 = vmatpush1.msra.mxu0 0.0
  %997 = vmatprep.subr.mxu0 0.0
  %998 = vmatpush1.msra.mxu0 0.0
  %999 = vmatprep.subr.mxu0 0.0
  %1000 = vmatpush1.msra.mxu0 0.0
  %1001 = vmatprep.subr.mxu0 0.0
  %1002 = vmatpush1.msra.mxu0 0.0
  %1003 = vmatprep.subr.mxu0 0.0
  %1004 = vmatpush1.msra.mxu0 0.0
  %1005 = vmatprep.subr.mxu0 0.0
  %1006 = vmatpush1.msra.mxu0 0.0
  %1007 = vmatprep.subr.mxu0 0.0
  %1008 = vmatpush1.msra.mxu0 0.0
  %1009 = vmatprep.subr.mxu0 0.0
  %1010 = vmatpush1.msra.mxu0 0.0
  %1011 = vmatprep.subr.mxu0 0.0
  %1012 = vmatpush1.msra.mxu0 0.0
  %1013 = vmatprep.subr.mxu0 0.0
  %1014 = vmatpush1.msra.mxu0 0.0
  %1015 = vmatprep.subr.mxu0 0.0
  %1016 = vmatpush1.msra.mxu0 %v45
  %1017 = vmatprep.subr.mxu0 0.0
  %1018 = vmatpush1.msra.mxu0 %v44
  %1019 = vmatprep.subr.mxu0 0.0
  %1020 = vmatpush2.msra.mxu0 0.0
  %1021 = vmatprep.subr.mxu0 0.0
  %1022 = vmatpush2.msra.mxu0 0.0
  %1023 = vmatprep.subr.mxu0 0.0
  %1024 = vmatpush2.msra.mxu0 0.0
  %1025 = vmatprep.subr.mxu0 0.0
  %1026 = vmatpush2.msra.mxu0 0.0
  %1027 = vmatprep.subr.mxu0 0.0
  %1028 = vmatpush2.msra.mxu0 0.0
  %1029 = vmatprep.subr.mxu0 0.0
  %1030 = vmatpush2.msra.mxu0 0.0
  %1031 = vmatprep.subr.mxu0 0.0
  %1032 = vmatpush2.msra.mxu0 0.0
  %1033 = vmatprep.subr.mxu0 0.0
  %1034 = vmatpush2.msra.mxu0 0.0
  %1035 = vmatprep.subr.mxu0 0.0
  %1036 = vmatpush2.msra.mxu0 0.0
  %1037 = vmatprep.subr.mxu0 0.0
  %1038 = vmatpush2.msra.mxu0 0.0
  %1039 = vmatprep.subr.mxu0 0.0
  %1040 = vmatpush2.msra.mxu0 0.0
  %1041 = vmatprep.subr.mxu0 0.0
  %1042 = vmatpush2.msra.mxu0 0.0
  %1043 = vmatprep.subr.mxu0 0.0
  %1044 = vmatpush2.msra.mxu0 0.0
  %1045 = vmatprep.subr.mxu0 0.0
  %1046 = vmatpush2.msra.mxu0 0.0
  %1047 = vmatprep.subr.mxu0 0.0
  %1048 = vmatpush2.msra.mxu0 0.0
  %1049 = vmatprep.subr.mxu0 0.0
  %1050 = vmatpush2.msra.mxu0 0.0
  %1051 = vmatprep.mubr.f32.mxu0 0.0
  %1052 = vmatmul.mubr.f32.gmra.mxu0 %v982
  %v1053 = vpop.f32.mrf.mxu0
  %v1054 = vadd.f32 0.0, %v1053
  %v1055 = vpop.f32.mrf.mxu0
  %1056 = vmatprep.mubr.f32.mxu0 0.0
  %1057 = vmatmul.mubr.f32.gmra.mxu0 %v985
  %v1058 = vpop.f32.mrf.mxu0
  %v1059 = vadd.f32 0.0, %v1058
  %v1060 = vpop.f32.mrf.mxu0
  %1061 = vdwg.mxu0
  %v1063 = vsel %vm755, %v829, 0
  %v1066 = vsel %vm755, %v831, 0
  %1068 = vmatprep.subr.mxu0 0.0
  %1069 = vmatpush1.msra.mxu0 0.0
  %1070 = vmatprep.subr.mxu0 0.0
  %1071 = vmatpush1.msra.mxu0 0.0
  %1072 = vmatprep.subr.mxu0 0.0
  %1073 = vmatpush1.msra.mxu0 0.0
  %1074 = vmatprep.subr.mxu0 0.0
  %1075 = vmatpush1.msra.mxu0 0.0
  %1076 = vmatprep.subr.mxu0 0.0
  %1077 = vmatpush1.msra.mxu0 0.0
  %1078 = vmatprep.subr.mxu0 0.0
  %1079 = vmatpush1.msra.mxu0 0.0
  %1080 = vmatprep.subr.mxu0 0.0
  %1081 = vmatpush1.msra.mxu0 0.0
  %1082 = vmatprep.subr.mxu0 0.0
  %1083 = vmatpush1.msra.mxu0 0.0
  %1084 = vmatprep.subr.mxu0 0.0
  %1085 = vmatpush1.msra.mxu0 0.0
  %1086 = vmatprep.subr.mxu0 0.0
  %1087 = vmatpush1.msra.mxu0 0.0
  %1088 = vmatprep.subr.mxu0 0.0
  %1089 = vmatpush1.msra.mxu0 0.0
  %1090 = vmatprep.subr.mxu0 0.0
  %1091 = vmatpush1.msra.mxu0 0.0
  %1092 = vmatprep.subr.mxu0 0.0
  %1093 = vmatpush1.msra.mxu0 0.0
  %1094 = vmatprep.subr.mxu0 0.0
  %1095 = vmatpush1.msra.mxu0 0.0
  %1096 = vmatprep.subr.mxu0 0.0
  %1097 = vmatpush1.msra.mxu0 %v47
  %1098 = vmatprep.subr.mxu0 0.0
  %1099 = vmatpush1.msra.mxu0 %v46
  %1100 = vmatprep.subr.mxu0 0.0
  %1101 = vmatpush2.msra.mxu0 0.0
  %1102 = vmatprep.subr.mxu0 0.0
  %1103 = vmatpush2.msra.mxu0 0.0
  %1104 = vmatprep.subr.mxu0 0.0
  %1105 = vmatpush2.msra.mxu0 0.0
  %1106 = vmatprep.subr.mxu0 0.0
  %1107 = vmatpush2.msra.mxu0 0.0
  %1108 = vmatprep.subr.mxu0 0.0
  %1109 = vmatpush2.msra.mxu0 0.0
  %1110 = vmatprep.subr.mxu0 0.0
  %1111 = vmatpush2.msra.mxu0 0.0
  %1112 = vmatprep.subr.mxu0 0.0
  %1113 = vmatpush2.msra.mxu0 0.0
  %1114 = vmatprep.subr.mxu0 0.0
  %1115 = vmatpush2.msra.mxu0 0.0
  %1116 = vmatprep.subr.mxu0 0.0
  %1117 = vmatpush2.msra.mxu0 0.0
  %1118 = vmatprep.subr.mxu0 0.0
  %1119 = vmatpush2.msra.mxu0 0.0
  %1120 = vmatprep.subr.mxu0 0.0
  %1121 = vmatpush2.msra.mxu0 0.0
  %1122 = vmatprep.subr.mxu0 0.0
  %1123 = vmatpush2.msra.mxu0 0.0
  %1124 = vmatprep.subr.mxu0 0.0
  %1125 = vmatpush2.msra.mxu0 0.0
  %1126 = vmatprep.subr.mxu0 0.0
  %1127 = vmatpush2.msra.mxu0 0.0
  %1128 = vmatprep.subr.mxu0 0.0
  %1129 = vmatpush2.msra.mxu0 0.0
  %1130 = vmatprep.subr.mxu0 0.0
  %1131 = vmatpush2.msra.mxu0 0.0
  %1132 = vmatprep.mubr.f32.mxu0 0.0
  %1133 = vmatmul.mubr.f32.gmra.mxu0 %v1063
  %v1134 = vpop.f32.mrf.mxu0
  %v1135 = vadd.f32 0.0, %v1134
  %v1136 = vpop.f32.mrf.mxu0
  %1137 = vmatprep.mubr.f32.mxu0 0.0
  %1138 = vmatmul.mubr.f32.gmra.mxu0 %v1066
  %v1139 = vpop.f32.mrf.mxu0
  %v1140 = vadd.f32 0.0, %v1139
  %v1141 = vpop.f32.mrf.mxu0
  %1142 = vdwg.mxu0
  %v1144 = vsel %vm755, %v833, 0
  %v1147 = vsel %vm755, %v835, 0
  %1149 = vmatprep.subr.mxu0 0.0
  %1150 = vmatpush1.msra.mxu0 0.0
  %1151 = vmatprep.subr.mxu0 0.0
  %1152 = vmatpush1.msra.mxu0 0.0
  %1153 = vmatprep.subr.mxu0 0.0
  %1154 = vmatpush1.msra.mxu0 0.0
  %1155 = vmatprep.subr.mxu0 0.0
  %1156 = vmatpush1.msra.mxu0 0.0
  %1157 = vmatprep.subr.mxu0 0.0
  %1158 = vmatpush1.msra.mxu0 0.0
  %1159 = vmatprep.subr.mxu0 0.0
  %1160 = vmatpush1.msra.mxu0 0.0
  %1161 = vmatprep.subr.mxu0 0.0
  %1162 = vmatpush1.msra.mxu0 0.0
  %1163 = vmatprep.subr.mxu0 0.0
  %1164 = vmatpush1.msra.mxu0 0.0
  %1165 = vmatprep.subr.mxu0 0.0
  %1166 = vmatpush1.msra.mxu0 0.0
  %1167 = vmatprep.subr.mxu0 0.0
  %1168 = vmatpush1.msra.mxu0 0.0
  %1169 = vmatprep.subr.mxu0 0.0
  %1170 = vmatpush1.msra.mxu0 0.0
  %1171 = vmatprep.subr.mxu0 0.0
  %1172 = vmatpush1.msra.mxu0 0.0
  %1173 = vmatprep.subr.mxu0 0.0
  %1174 = vmatpush1.msra.mxu0 0.0
  %1175 = vmatprep.subr.mxu0 0.0
  %1176 = vmatpush1.msra.mxu0 0.0
  %1177 = vmatprep.subr.mxu0 0.0
  %1178 = vmatpush1.msra.mxu0 %v49
  %1179 = vmatprep.subr.mxu0 0.0
  %1180 = vmatpush1.msra.mxu0 %v48
  %1181 = vmatprep.subr.mxu0 0.0
  %1182 = vmatpush2.msra.mxu0 0.0
  %1183 = vmatprep.subr.mxu0 0.0
  %1184 = vmatpush2.msra.mxu0 0.0
  %1185 = vmatprep.subr.mxu0 0.0
  %1186 = vmatpush2.msra.mxu0 0.0
  %1187 = vmatprep.subr.mxu0 0.0
  %1188 = vmatpush2.msra.mxu0 0.0
  %1189 = vmatprep.subr.mxu0 0.0
  %1190 = vmatpush2.msra.mxu0 0.0
  %1191 = vmatprep.subr.mxu0 0.0
  %1192 = vmatpush2.msra.mxu0 0.0
  %1193 = vmatprep.subr.mxu0 0.0
  %1194 = vmatpush2.msra.mxu0 0.0
  %1195 = vmatprep.subr.mxu0 0.0
  %1196 = vmatpush2.msra.mxu0 0.0
  %1197 = vmatprep.subr.mxu0 0.0
  %1198 = vmatpush2.msra.mxu0 0.0
  %1199 = vmatprep.subr.mxu0 0.0
  %1200 = vmatpush2.msra.mxu0 0.0
  %1201 = vmatprep.subr.mxu0 0.0
  %1202 = vmatpush2.msra.mxu0 0.0
  %1203 = vmatprep.subr.mxu0 0.0
  %1204 = vmatpush2.msra.mxu0 0.0
  %1205 = vmatprep.subr.mxu0 0.0
  %1206 = vmatpush2.msra.mxu0 0.0
  %1207 = vmatprep.subr.mxu0 0.0
  %1208 = vmatpush2.msra.mxu0 0.0
  %1209 = vmatprep.subr.mxu0 0.0
  %1210 = vmatpush2.msra.mxu0 0.0
  %1211 = vmatprep.subr.mxu0 0.0
  %1212 = vmatpush2.msra.mxu0 0.0
  %1213 = vmatprep.mubr.f32.mxu0 0.0
  %1214 = vmatmul.mubr.f32.gmra.mxu0 %v1144
  %v1215 = vpop.f32.mrf.mxu0
  %v1216 = vadd.f32 0.0, %v1215
  %v1217 = vpop.f32.mrf.mxu0
  %1218 = vmatprep.mubr.f32.mxu0 0.0
  %1219 = vmatmul.mubr.f32.gmra.mxu0 %v1147
  %v1220 = vpop.f32.mrf.mxu0
  %v1221 = vadd.f32 0.0, %v1220
  %v1222 = vpop.f32.mrf.mxu0
  %1223 = vdwg.mxu0
  %v1225 = vsel %vm755, %v837, 0
  %v1228 = vsel %vm755, %v839, 0
  %1230 = vmatprep.subr.mxu0 0.0
  %1231 = vmatpush1.msra.mxu0 0.0
  %1232 = vmatprep.subr.mxu0 0.0
  %1233 = vmatpush1.msra.mxu0 0.0
  %1234 = vmatprep.subr.mxu0 0.0
  %1235 = vmatpush1.msra.mxu0 0.0
  %1236 = vmatprep.subr.mxu0 0.0
  %1237 = vmatpush1.msra.mxu0 0.0
  %1238 = vmatprep.subr.mxu0 0.0
  %1239 = vmatpush1.msra.mxu0 0.0
  %1240 = vmatprep.subr.mxu0 0.0
  %1241 = vmatpush1.msra.mxu0 0.0
  %1242 = vmatprep.subr.mxu0 0.0
  %1243 = vmatpush1.msra.mxu0 0.0
  %1244 = vmatprep.subr.mxu0 0.0
  %1245 = vmatpush1.msra.mxu0 0.0
  %1246 = vmatprep.subr.mxu0 0.0
  %1247 = vmatpush1.msra.mxu0 0.0
  %1248 = vmatprep.subr.mxu0 0.0
  %1249 = vmatpush1.msra.mxu0 0.0
  %1250 = vmatprep.subr.mxu0 0.0
  %1251 = vmatpush1.msra.mxu0 0.0
  %1252 = vmatprep.subr.mxu0 0.0
  %1253 = vmatpush1.msra.mxu0 0.0
  %1254 = vmatprep.subr.mxu0 0.0
  %1255 = vmatpush1.msra.mxu0 0.0
  %1256 = vmatprep.subr.mxu0 0.0
  %1257 = vmatpush1.msra.mxu0 0.0
  %1258 = vmatprep.subr.mxu0 0.0
  %1259 = vmatpush1.msra.mxu0 %v51
  %1260 = vmatprep.subr.mxu0 0.0
  %1261 = vmatpush1.msra.mxu0 %v50
  %1262 = vmatprep.subr.mxu0 0.0
  %1263 = vmatpush2.msra.mxu0 0.0
  %1264 = vmatprep.subr.mxu0 0.0
  %1265 = vmatpush2.msra.mxu0 0.0
  %1266 = vmatprep.subr.mxu0 0.0
  %1267 = vmatpush2.msra.mxu0 0.0
  %1268 = vmatprep.subr.mxu0 0.0
  %1269 = vmatpush2.msra.mxu0 0.0
  %1270 = vmatprep.subr.mxu0 0.0
  %1271 = vmatpush2.msra.mxu0 0.0
  %1272 = vmatprep.subr.mxu0 0.0
  %1273 = vmatpush2.msra.mxu0 0.0
  %1274 = vmatprep.subr.mxu0 0.0
  %1275 = vmatpush2.msra.mxu0 0.0
  %1276 = vmatprep.subr.mxu0 0.0
  %1277 = vmatpush2.msra.mxu0 0.0
  %1278 = vmatprep.subr.mxu0 0.0
  %1279 = vmatpush2.msra.mxu0 0.0
  %1280 = vmatprep.subr.mxu0 0.0
  %1281 = vmatpush2.msra.mxu0 0.0
  %1282 = vmatprep.subr.mxu0 0.0
  %1283 = vmatpush2.msra.mxu0 0.0
  %1284 = vmatprep.subr.mxu0 0.0
  %1285 = vmatpush2.msra.mxu0 0.0
  %1286 = vmatprep.subr.mxu0 0.0
  %1287 = vmatpush2.msra.mxu0 0.0
  %1288 = vmatprep.subr.mxu0 0.0
  %1289 = vmatpush2.msra.mxu0 0.0
  %1290 = vmatprep.subr.mxu0 0.0
  %1291 = vmatpush2.msra.mxu0 0.0
  %1292 = vmatprep.subr.mxu0 0.0
  %1293 = vmatpush2.msra.mxu0 0.0
  %1294 = vmatprep.mubr.f32.mxu0 0.0
  %1295 = vmatmul.mubr.f32.gmra.mxu0 %v1225
  %v1296 = vpop.f32.mrf.mxu0
  %v1297 = vadd.f32 0.0, %v1296
  %v1298 = vpop.f32.mrf.mxu0
  %1299 = vmatprep.mubr.f32.mxu0 0.0
  %1300 = vmatmul.mubr.f32.gmra.mxu0 %v1228
  %v1301 = vpop.f32.mrf.mxu0
  %v1302 = vadd.f32 0.0, %v1301
  %v1303 = vpop.f32.mrf.mxu0
  %1304 = vdwg.mxu0
  %v1306 = vsel %vm755, %v841, 0
  %v1309 = vsel %vm755, %v843, 0
  %1311 = vmatprep.subr.mxu0 0.0
  %1312 = vmatpush1.msra.mxu0 0.0
  %1313 = vmatprep.subr.mxu0 0.0
  %1314 = vmatpush1.msra.mxu0 0.0
  %1315 = vmatprep.subr.mxu0 0.0
  %1316 = vmatpush1.msra.mxu0 0.0
  %1317 = vmatprep.subr.mxu0 0.0
  %1318 = vmatpush1.msra.mxu0 0.0
  %1319 = vmatprep.subr.mxu0 0.0
  %1320 = vmatpush1.msra.mxu0 0.0
  %1321 = vmatprep.subr.mxu0 0.0
  %1322 = vmatpush1.msra.mxu0 0.0
  %1323 = vmatprep.subr.mxu0 0.0
  %1324 = vmatpush1.msra.mxu0 0.0
  %1325 = vmatprep.subr.mxu0 0.0
  %1326 = vmatpush1.msra.mxu0 0.0
  %1327 = vmatprep.subr.mxu0 0.0
  %1328 = vmatpush1.msra.mxu0 0.0
  %1329 = vmatprep.subr.mxu0 0.0
  %1330 = vmatpush1.msra.mxu0 0.0
  %1331 = vmatprep.subr.mxu0 0.0
  %1332 = vmatpush1.msra.mxu0 0.0
  %1333 = vmatprep.subr.mxu0 0.0
  %1334 = vmatpush1.msra.mxu0 0.0
  %1335 = vmatprep.subr.mxu0 0.0
  %1336 = vmatpush1.msra.mxu0 0.0
  %1337 = vmatprep.subr.mxu0 0.0
  %1338 = vmatpush1.msra.mxu0 0.0
  %1339 = vmatprep.subr.mxu0 0.0
  %1340 = vmatpush1.msra.mxu0 %v53
  %1341 = vmatprep.subr.mxu0 0.0
  %1342 = vmatpush1.msra.mxu0 %v52
  %1343 = vmatprep.subr.mxu0 0.0
  %1344 = vmatpush2.msra.mxu0 0.0
  %1345 = vmatprep.subr.mxu0 0.0
  %1346 = vmatpush2.msra.mxu0 0.0
  %1347 = vmatprep.subr.mxu0 0.0
  %1348 = vmatpush2.msra.mxu0 0.0
  %1349 = vmatprep.subr.mxu0 0.0
  %1350 = vmatpush2.msra.mxu0 0.0
  %1351 = vmatprep.subr.mxu0 0.0
  %1352 = vmatpush2.msra.mxu0 0.0
  %1353 = vmatprep.subr.mxu0 0.0
  %1354 = vmatpush2.msra.mxu0 0.0
  %1355 = vmatprep.subr.mxu0 0.0
  %1356 = vmatpush2.msra.mxu0 0.0
  %1357 = vmatprep.subr.mxu0 0.0
  %1358 = vmatpush2.msra.mxu0 0.0
  %1359 = vmatprep.subr.mxu0 0.0
  %1360 = vmatpush2.msra.mxu0 0.0
  %1361 = vmatprep.subr.mxu0 0.0
  %1362 = vmatpush2.msra.mxu0 0.0
  %1363 = vmatprep.subr.mxu0 0.0
  %1364 = vmatpush2.msra.mxu0 0.0
  %1365 = vmatprep.subr.mxu0 0.0
  %1366 = vmatpush2.msra.mxu0 0.0
  %1367 = vmatprep.subr.mxu0 0.0
  %1368 = vmatpush2.msra.mxu0 0.0
  %1369 = vmatprep.subr.mxu0 0.0
  %1370 = vmatpush2.msra.mxu0 0.0
  %1371 = vmatprep.subr.mxu0 0.0
  %1372 = vmatpush2.msra.mxu0 0.0
  %1373 = vmatprep.subr.mxu0 0.0
  %1374 = vmatpush2.msra.mxu0 0.0
  %1375 = vmatprep.mubr.f32.mxu0 0.0
  %1376 = vmatmul.mubr.f32.gmra.mxu0 %v1306
  %v1377 = vpop.f32.mrf.mxu0
  %v1378 = vadd.f32 0.0, %v1377
  %v1379 = vpop.f32.mrf.mxu0
  %1380 = vmatprep.mubr.f32.mxu0 0.0
  %1381 = vmatmul.mubr.f32.gmra.mxu0 %v1309
  %v1382 = vpop.f32.mrf.mxu0
  %v1383 = vadd.f32 0.0, %v1382
  %v1384 = vpop.f32.mrf.mxu0
  %1385 = vdwg.mxu0
  %v1387 = vsel %vm755, %v845, 0
  %v1390 = vsel %vm755, %v847, 0
  %1392 = vmatprep.subr.mxu0 0.0
  %1393 = vmatpush1.msra.mxu0 0.0
  %1394 = vmatprep.subr.mxu0 0.0
  %1395 = vmatpush1.msra.mxu0 0.0
  %1396 = vmatprep.subr.mxu0 0.0
  %1397 = vmatpush1.msra.mxu0 0.0
  %1398 = vmatprep.subr.mxu0 0.0
  %1399 = vmatpush1.msra.mxu0 0.0
  %1400 = vmatprep.subr.mxu0 0.0
  %1401 = vmatpush1.msra.mxu0 0.0
  %1402 = vmatprep.subr.mxu0 0.0
  %1403 = vmatpush1.msra.mxu0 0.0
  %1404 = vmatprep.subr.mxu0 0.0
  %1405 = vmatpush1.msra.mxu0 0.0
  %1406 = vmatprep.subr.mxu0 0.0
  %1407 = vmatpush1.msra.mxu0 0.0
  %1408 = vmatprep.subr.mxu0 0.0
  %1409 = vmatpush1.msra.mxu0 0.0
  %1410 = vmatprep.subr.mxu0 0.0
  %1411 = vmatpush1.msra.mxu0 0.0
  %1412 = vmatprep.subr.mxu0 0.0
  %1413 = vmatpush1.msra.mxu0 0.0
  %1414 = vmatprep.subr.mxu0 0.0
  %1415 = vmatpush1.msra.mxu0 0.0
  %1416 = vmatprep.subr.mxu0 0.0
  %1417 = vmatpush1.msra.mxu0 0.0
  %1418 = vmatprep.subr.mxu0 0.0
  %1419 = vmatpush1.msra.mxu0 0.0
  %1420 = vmatprep.subr.mxu0 0.0
  %1421 = vmatpush1.msra.mxu0 %v55
  %1422 = vmatprep.subr.mxu0 0.0
  %1423 = vmatpush1.msra.mxu0 %v54
  %1424 = vmatprep.subr.mxu0 0.0
  %1425 = vmatpush2.msra.mxu0 0.0
  %1426 = vmatprep.subr.mxu0 0.0
  %1427 = vmatpush2.msra.mxu0 0.0
  %1428 = vmatprep.subr.mxu0 0.0
  %1429 = vmatpush2.msra.mxu0 0.0
  %1430 = vmatprep.subr.mxu0 0.0
  %1431 = vmatpush2.msra.mxu0 0.0
  %1432 = vmatprep.subr.mxu0 0.0
  %1433 = vmatpush2.msra.mxu0 0.0
  %1434 = vmatprep.subr.mxu0 0.0
  %1435 = vmatpush2.msra.mxu0 0.0
  %1436 = vmatprep.subr.mxu0 0.0
  %1437 = vmatpush2.msra.mxu0 0.0
  %1438 = vmatprep.subr.mxu0 0.0
  %1439 = vmatpush2.msra.mxu0 0.0
  %1440 = vmatprep.subr.mxu0 0.0
  %1441 = vmatpush2.msra.mxu0 0.0
  %1442 = vmatprep.subr.mxu0 0.0
  %1443 = vmatpush2.msra.mxu0 0.0
  %1444 = vmatprep.subr.mxu0 0.0
  %1445 = vmatpush2.msra.mxu0 0.0
  %1446 = vmatprep.subr.mxu0 0.0
  %1447 = vmatpush2.msra.mxu0 0.0
  %1448 = vmatprep.subr.mxu0 0.0
  %1449 = vmatpush2.msra.mxu0 0.0
  %1450 = vmatprep.subr.mxu0 0.0
  %1451 = vmatpush2.msra.mxu0 0.0
  %1452 = vmatprep.subr.mxu0 0.0
  %1453 = vmatpush2.msra.mxu0 0.0
  %1454 = vmatprep.subr.mxu0 0.0
  %1455 = vmatpush2.msra.mxu0 0.0
  %1456 = vmatprep.mubr.f32.mxu0 0.0
  %1457 = vmatmul.mubr.f32.gmra.mxu0 %v1387
  %v1458 = vpop.f32.mrf.mxu0
  %v1459 = vadd.f32 0.0, %v1458
  %v1460 = vpop.f32.mrf.mxu0
  %1461 = vmatprep.mubr.f32.mxu0 0.0
  %1462 = vmatmul.mubr.f32.gmra.mxu0 %v1390
  %v1463 = vpop.f32.mrf.mxu0
  %v1464 = vadd.f32 0.0, %v1463
  %v1465 = vpop.f32.mrf.mxu0
  %1466 = vdwg.mxu0
  %v1468 = vsel %vm755, %v849, 0
  %v1471 = vsel %vm755, %v851, 0
  %1473 = vmatprep.subr.mxu0 0.0
  %1474 = vmatpush1.msra.mxu0 0.0
  %1475 = vmatprep.subr.mxu0 0.0
  %1476 = vmatpush1.msra.mxu0 0.0
  %1477 = vmatprep.subr.mxu0 0.0
  %1478 = vmatpush1.msra.mxu0 0.0
  %1479 = vmatprep.subr.mxu0 0.0
  %1480 = vmatpush1.msra.mxu0 0.0
  %1481 = vmatprep.subr.mxu0 0.0
  %1482 = vmatpush1.msra.mxu0 0.0
  %1483 = vmatprep.subr.mxu0 0.0
  %1484 = vmatpush1.msra.mxu0 0.0
  %1485 = vmatprep.subr.mxu0 0.0
  %1486 = vmatpush1.msra.mxu0 0.0
  %1487 = vmatprep.subr.mxu0 0.0
  %1488 = vmatpush1.msra.mxu0 0.0
  %1489 = vmatprep.subr.mxu0 0.0
  %1490 = vmatpush1.msra.mxu0 0.0
  %1491 = vmatprep.subr.mxu0 0.0
  %1492 = vmatpush1.msra.mxu0 0.0
  %1493 = vmatprep.subr.mxu0 0.0
  %1494 = vmatpush1.msra.mxu0 0.0
  %1495 = vmatprep.subr.mxu0 0.0
  %1496 = vmatpush1.msra.mxu0 0.0
  %1497 = vmatprep.subr.mxu0 0.0
  %1498 = vmatpush1.msra.mxu0 0.0
  %1499 = vmatprep.subr.mxu0 0.0
  %1500 = vmatpush1.msra.mxu0 0.0
  %1501 = vmatprep.subr.mxu0 0.0
  %1502 = vmatpush1.msra.mxu0 %v57
  %1503 = vmatprep.subr.mxu0 0.0
  %1504 = vmatpush1.msra.mxu0 %v56
  %1505 = vmatprep.subr.mxu0 0.0
  %1506 = vmatpush2.msra.mxu0 0.0
  %1507 = vmatprep.subr.mxu0 0.0
  %1508 = vmatpush2.msra.mxu0 0.0
  %1509 = vmatprep.subr.mxu0 0.0
  %1510 = vmatpush2.msra.mxu0 0.0
  %1511 = vmatprep.subr.mxu0 0.0
  %1512 = vmatpush2.msra.mxu0 0.0
  %1513 = vmatprep.subr.mxu0 0.0
  %1514 = vmatpush2.msra.mxu0 0.0
  %1515 = vmatprep.subr.mxu0 0.0
  %1516 = vmatpush2.msra.mxu0 0.0
  %1517 = vmatprep.subr.mxu0 0.0
  %1518 = vmatpush2.msra.mxu0 0.0
  %1519 = vmatprep.subr.mxu0 0.0
  %1520 = vmatpush2.msra.mxu0 0.0
  %1521 = vmatprep.subr.mxu0 0.0
  %1522 = vmatpush2.msra.mxu0 0.0
  %1523 = vmatprep.subr.mxu0 0.0
  %1524 = vmatpush2.msra.mxu0 0.0
  %1525 = vmatprep.subr.mxu0 0.0
  %1526 = vmatpush2.msra.mxu0 0.0
  %1527 = vmatprep.subr.mxu0 0.0
  %1528 = vmatpush2.msra.mxu0 0.0
  %1529 = vmatprep.subr.mxu0 0.0
  %1530 = vmatpush2.msra.mxu0 0.0
  %1531 = vmatprep.subr.mxu0 0.0
  %1532 = vmatpush2.msra.mxu0 0.0
  %1533 = vmatprep.subr.mxu0 0.0
  %1534 = vmatpush2.msra.mxu0 0.0
  %1535 = vmatprep.subr.mxu0 0.0
  %1536 = vmatpush2.msra.mxu0 0.0
  %1537 = vmatprep.mubr.f32.mxu0 0.0
  %1538 = vmatmul.mubr.f32.gmra.mxu0 %v1468
  %v1539 = vpop.f32.mrf.mxu0
  %v1540 = vadd.f32 0.0, %v1539
  %v1541 = vpop.f32.mrf.mxu0
  %1542 = vmatprep.mubr.f32.mxu0 0.0
  %1543 = vmatmul.mubr.f32.gmra.mxu0 %v1471
  %v1544 = vpop.f32.mrf.mxu0
  %v1545 = vadd.f32 0.0, %v1544
  %v1546 = vpop.f32.mrf.mxu0
  %1547 = vdwg.mxu0
  %v1548 = vrcp.pop %v854
  %v1549 = vrcp.pop %v857
  %v1550 = vrcp.pop %v860
  %v1551 = vrcp.pop %v863
  %v1552 = vrcp.pop %v866
  %v1553 = vrcp.pop %v869
  %v1554 = vrcp.pop %v872
  %v1555 = vrcp.pop %v875
  %v1556 = vrcp.pop %v878
  %v1557 = vrcp.pop %v881
  %v1558 = vrcp.pop %v884
  %v1559 = vrcp.pop %v887
  %v1560 = vrcp.pop %v890
  %v1561 = vrcp.pop %v893
  %v1562 = vrcp.pop %v896
  %v1563 = vrcp.pop %v899
  %v1564 = vmul.f32 %v973, %v1548
  %v1565 = vmul.f32 %v978, %v1549
  %v1566 = vmul.f32 %v1054, %v1550
  %v1567 = vmul.f32 %v1059, %v1551
  %v1568 = vmul.f32 %v1135, %v1552
  %v1569 = vmul.f32 %v1140, %v1553
  %v1570 = vmul.f32 %v1216, %v1554
  %v1571 = vmul.f32 %v1221, %v1555
  %v1572 = vmul.f32 %v1297, %v1556
  %v1573 = vmul.f32 %v1302, %v1557
  %v1574 = vmul.f32 %v1378, %v1558
  %v1575 = vmul.f32 %v1383, %v1559
  %v1576 = vmul.f32 %v1459, %v1560
  %v1577 = vmul.f32 %v1464, %v1561
  %v1578 = vmul.f32 %v1540, %v1562
  %v1579 = vmul.f32 %v1545, %v1563
  %v1580 = vsel %vm58, %v1564, 0.0
  %v1581 = vsel %vm58, %v1565, 0.0
  %v1582 = vadd.f32 %v1580, %v1581
  %v1583 = vrot.slane %v1582, 4
  %v1584 = vadd.f32 %v1582, %v1583
  %v1585 = vrot.slane %v1584, 2
  %v1586 = vadd.f32 %v1584, %v1585
  %v1587 = vrot.slane %v1586, 1
  %v1588 = vadd.f32 %v1586, %v1587
  %v1589 = vsel %vm58, %v1566, 0.0
  %v1590 = vsel %vm58, %v1567, 0.0
  %v1591 = vadd.f32 %v1589, %v1590
  %v1592 = vrot.slane %v1591, 4
  %v1593 = vadd.f32 %v1591, %v1592
  %v1594 = vrot.slane %v1593, 2
  %v1595 = vadd.f32 %v1593, %v1594
  %v1596 = vrot.slane %v1595, 1
  %v1597 = vadd.f32 %v1595, %v1596
  %v1598 = vsel %vm58, %v1568, 0.0
  %v1599 = vsel %vm58, %v1569, 0.0
  %v1600 = vadd.f32 %v1598, %v1599
  %v1601 = vrot.slane %v1600, 4
  %v1602 = vadd.f32 %v1600, %v1601
  %v1603 = vrot.slane %v1602, 2
  %v1604 = vadd.f32 %v1602, %v1603
  %v1605 = vrot.slane %v1604, 1
  %v1606 = vadd.f32 %v1604, %v1605
  %v1607 = vsel %vm58, %v1570, 0.0
  %v1608 = vsel %vm58, %v1571, 0.0
  %v1609 = vadd.f32 %v1607, %v1608
  %v1610 = vrot.slane %v1609, 4
  %v1611 = vadd.f32 %v1609, %v1610
  %v1612 = vrot.slane %v1611, 2
  %v1613 = vadd.f32 %v1611, %v1612
  %v1614 = vrot.slane %v1613, 1
  %v1615 = vadd.f32 %v1613, %v1614
  %v1616 = vsel %vm58, %v1572, 0.0
  %v1617 = vsel %vm58, %v1573, 0.0
  %v1618 = vadd.f32 %v1616, %v1617
  %v1619 = vrot.slane %v1618, 4
  %v1620 = vadd.f32 %v1618, %v1619
  %v1621 = vrot.slane %v1620, 2
  %v1622 = vadd.f32 %v1620, %v1621
  %v1623 = vrot.slane %v1622, 1
  %v1624 = vadd.f32 %v1622, %v1623
  %v1625 = vsel %vm58, %v1574, 0.0
  %v1626 = vsel %vm58, %v1575, 0.0
  %v1627 = vadd.f32 %v1625, %v1626
  %v1628 = vrot.slane %v1627, 4
  %v1629 = vadd.f32 %v1627, %v1628
  %v1630 = vrot.slane %v1629, 2
  %v1631 = vadd.f32 %v1629, %v1630
  %v1632 = vrot.slane %v1631, 1
  %v1633 = vadd.f32 %v1631, %v1632
  %v1634 = vsel %vm58, %v1576, 0.0
  %v1635 = vsel %vm58, %v1577, 0.0
  %v1636 = vadd.f32 %v1634, %v1635
  %v1637 = vrot.slane %v1636, 4
  %v1638 = vadd.f32 %v1636, %v1637
  %v1639 = vrot.slane %v1638, 2
  %v1640 = vadd.f32 %v1638, %v1639
  %v1641 = vrot.slane %v1640, 1
  %v1642 = vadd.f32 %v1640, %v1641
  %v1643 = vsel %vm58, %v1578, 0.0
  %v1644 = vsel %vm58, %v1579, 0.0
  %v1645 = vadd.f32 %v1643, %v1644
  %v1646 = vrot.slane %v1645, 4
  %v1647 = vadd.f32 %v1645, %v1646
  %v1648 = vrot.slane %v1647, 2
  %v1649 = vadd.f32 %v1647, %v1648
  %v1650 = vrot.slane %v1649, 1
  %v1651 = vadd.f32 %v1649, %v1650
  %v1652 = vsel %vm58, %v1588, 0.0
  %v1653 = vsel %vm58, %v1624, 0.0
  %v1654 = vadd.f32 %v1652, %v1653
  %v1655 = vsel %vm58, %v1597, 0.0
  %v1656 = vsel %vm58, %v1633, 0.0
  %v1657 = vadd.f32 %v1655, %v1656
  %v1658 = vsel %vm58, %v1606, 0.0
  %v1659 = vsel %vm58, %v1642, 0.0
  %v1660 = vadd.f32 %v1658, %v1659
  %v1661 = vsel %vm58, %v1615, 0.0
  %v1662 = vsel %vm58, %v1651, 0.0
  %v1663 = vadd.f32 %v1661, %v1662
  %v1664 = vrcp.pop 32.0
  %v1665 = vmul.f32 %v1654, %v1664
  %v1666 = vmul.f32 %v1657, %v1664
  %v1667 = vmul.f32 %v1660, %v1664
  %v1668 = vmul.f32 %v1663, %v1664
  %v1669 = vsub.f32 %v1564, %v1665
  %v1670 = vsub.f32 %v1565, %v1665
  %v1671 = vsub.f32 %v1566, %v1666
  %v1672 = vsub.f32 %v1567, %v1666
  %v1673 = vsub.f32 %v1568, %v1667
  %v1674 = vsub.f32 %v1569, %v1667
  %v1675 = vsub.f32 %v1570, %v1668
  %v1676 = vsub.f32 %v1571, %v1668
  %v1677 = vsub.f32 %v1572, %v1665
  %v1678 = vsub.f32 %v1573, %v1665
  %v1679 = vsub.f32 %v1574, %v1666
  %v1680 = vsub.f32 %v1575, %v1666
  %v1681 = vsub.f32 %v1576, %v1667
  %v1682 = vsub.f32 %v1577, %v1667
  %v1683 = vsub.f32 %v1578, %v1668
  %v1684 = vsub.f32 %v1579, %v1668
  %v1685 = vmul.f32 %v1669, %v1669
  %v1686 = vmul.f32 %v1670, %v1670
  %v1687 = vmul.f32 %v1671, %v1671
  %v1688 = vmul.f32 %v1672, %v1672
  %v1689 = vmul.f32 %v1673, %v1673
  %v1690 = vmul.f32 %v1674, %v1674
  %v1691 = vmul.f32 %v1675, %v1675
  %v1692 = vmul.f32 %v1676, %v1676
  %v1693 = vmul.f32 %v1677, %v1677
  %v1694 = vmul.f32 %v1678, %v1678
  %v1695 = vmul.f32 %v1679, %v1679
  %v1696 = vmul.f32 %v1680, %v1680
  %v1697 = vmul.f32 %v1681, %v1681
  %v1698 = vmul.f32 %v1682, %v1682
  %v1699 = vmul.f32 %v1683, %v1683
  %v1700 = vmul.f32 %v1684, %v1684
  %v1701 = vsel %vm58, %v1685, 0.0
  %v1702 = vsel %vm58, %v1686, 0.0
  %v1703 = vadd.f32 %v1701, %v1702
  %v1704 = vrot.slane %v1703, 4
  %v1705 = vadd.f32 %v1703, %v1704
  %v1706 = vrot.slane %v1705, 2
  %v1707 = vadd.f32 %v1705, %v1706
  %v1708 = vrot.slane %v1707, 1
  %v1709 = vadd.f32 %v1707, %v1708
  %v1710 = vsel %vm58, %v1687, 0.0
  %v1711 = vsel %vm58, %v1688, 0.0
  %v1712 = vadd.f32 %v1710, %v1711
  %v1713 = vrot.slane %v1712, 4
  %v1714 = vadd.f32 %v1712, %v1713
  %v1715 = vrot.slane %v1714, 2
  %v1716 = vadd.f32 %v1714, %v1715
  %v1717 = vrot.slane %v1716, 1
  %v1718 = vadd.f32 %v1716, %v1717
  %v1719 = vsel %vm58, %v1689, 0.0
  %v1720 = vsel %vm58, %v1690, 0.0
  %v1721 = vadd.f32 %v1719, %v1720
  %v1722 = vrot.slane %v1721, 4
  %v1723 = vadd.f32 %v1721, %v1722
  %v1724 = vrot.slane %v1723, 2
  %v1725 = vadd.f32 %v1723, %v1724
  %v1726 = vrot.slane %v1725, 1
  %v1727 = vadd.f32 %v1725, %v1726
  %v1728 = vsel %vm58, %v1691, 0.0
  %v1729 = vsel %vm58, %v1692, 0.0
  %v1730 = vadd.f32 %v1728, %v1729
  %v1731 = vrot.slane %v1730, 4
  %v1732 = vadd.f32 %v1730, %v1731
  %v1733 = vrot.slane %v1732, 2
  %v1734 = vadd.f32 %v1732, %v1733
  %v1735 = vrot.slane %v1734, 1
  %v1736 = vadd.f32 %v1734, %v1735
  %v1737 = vsel %vm58, %v1693, 0.0
  %v1738 = vsel %vm58, %v1694, 0.0
  %v1739 = vadd.f32 %v1737, %v1738
  %v1740 = vrot.slane %v1739, 4
  %v1741 = vadd.f32 %v1739, %v1740
  %v1742 = vrot.slane %v1741, 2
  %v1743 = vadd.f32 %v1741, %v1742
  %v1744 = vrot.slane %v1743, 1
  %v1745 = vadd.f32 %v1743, %v1744
  %v1746 = vsel %vm58, %v1695, 0.0
  %v1747 = vsel %vm58, %v1696, 0.0
  %v1748 = vadd.f32 %v1746, %v1747
  %v1749 = vrot.slane %v1748, 4
  %v1750 = vadd.f32 %v1748, %v1749
  %v1751 = vrot.slane %v1750, 2
  %v1752 = vadd.f32 %v1750, %v1751
  %v1753 = vrot.slane %v1752, 1
  %v1754 = vadd.f32 %v1752, %v1753
  %v1755 = vsel %vm58, %v1697, 0.0
  %v1756 = vsel %vm58, %v1698, 0.0
  %v1757 = vadd.f32 %v1755, %v1756
  %v1758 = vrot.slane %v1757, 4
  %v1759 = vadd.f32 %v1757, %v1758
  %v1760 = vrot.slane %v1759, 2
  %v1761 = vadd.f32 %v1759, %v1760
  %v1762 = vrot.slane %v1761, 1
  %v1763 = vadd.f32 %v1761, %v1762
  %v1764 = vsel %vm58, %v1699, 0.0
  %v1765 = vsel %vm58, %v1700, 0.0
  %v1766 = vadd.f32 %v1764, %v1765
  %v1767 = vrot.slane %v1766, 4
  %v1768 = vadd.f32 %v1766, %v1767
  %v1769 = vrot.slane %v1768, 2
  %v1770 = vadd.f32 %v1768, %v1769
  %v1771 = vrot.slane %v1770, 1
  %v1772 = vadd.f32 %v1770, %v1771
  %v1773 = vsel %vm58, %v1709, 0.0
  %v1774 = vsel %vm58, %v1745, 0.0
  %v1775 = vadd.f32 %v1773, %v1774
  %v1776 = vsel %vm58, %v1718, 0.0
  %v1777 = vsel %vm58, %v1754, 0.0
  %v1778 = vadd.f32 %v1776, %v1777
  %v1779 = vsel %vm58, %v1727, 0.0
  %v1780 = vsel %vm58, %v1763, 0.0
  %v1781 = vadd.f32 %v1779, %v1780
  %v1782 = vsel %vm58, %v1736, 0.0
  %v1783 = vsel %vm58, %v1772, 0.0
  %v1784 = vadd.f32 %v1782, %v1783
  %v1785 = vmul.f32 %v1775, %v1664
  %v1786 = vmul.f32 %v1778, %v1664
  %v1787 = vmul.f32 %v1781, %v1664
  %v1788 = vmul.f32 %v1784, %v1664
  %v1789 = vadd.f32 %v1785, 1e-05
  %v1790 = vadd.f32 %v1786, 1e-05
  %v1791 = vadd.f32 %v1787, 1e-05
  %v1792 = vadd.f32 %v1788, 1e-05
  %v1793 = vrsqrt.pop %v1789
  %v1794 = vrsqrt.pop %v1790
  %v1795 = vrsqrt.pop %v1791
  %v1796 = vrsqrt.pop %v1792
  %v1797 = vmul.f32 %v1669, %v1793
  %v1798 = vmul.f32 %v1670, %v1793
  %v1799 = vmul.f32 %v1671, %v1794
  %v1800 = vmul.f32 %v1672, %v1794
  %v1801 = vmul.f32 %v1673, %v1795
  %v1802 = vmul.f32 %v1674, %v1795
  %v1803 = vmul.f32 %v1675, %v1796
  %v1804 = vmul.f32 %v1676, %v1796
  %v1805 = vmul.f32 %v1677, %v1793
  %v1806 = vmul.f32 %v1678, %v1793
  %v1807 = vmul.f32 %v1679, %v1794
  %v1808 = vmul.f32 %v1680, %v1794
  %v1809 = vmul.f32 %v1681, %v1795
  %v1810 = vmul.f32 %v1682, %v1795
  %v1811 = vmul.f32 %v1683, %v1796
  %v1812 = vmul.f32 %v1684, %v1796
  %1813 = vst.msk [vmem:[%s1] sm:$0xff] %vm58, %v1797
  %1814 = vst.msk [vmem:[%s1 + $0x8] sm:$0xff] %vm58, %v1798
  %1815 = vst.msk [vmem:[%s1 + $0x10] sm:$0xff] %vm58, %v1799
  %1816 = vst.msk [vmem:[%s1 + $0x18] sm:$0xff] %vm58, %v1800
  %1817 = vst.msk [vmem:[%s1 + $0x20] sm:$0xff] %vm58, %v1801
  %1818 = vst.msk [vmem:[%s1 + $0x28] sm:$0xff] %vm58, %v1802
  %1819 = vst.msk [vmem:[%s1 + $0x30] sm:$0xff] %vm58, %v1803
  %1820 = vst.msk [vmem:[%s1 + $0x38] sm:$0xff] %vm58, %v1804
  %1821 = vst.msk [vmem:[%s1 + $0x40] sm:$0xff] %vm58, %v1805
  %1822 = vst.msk [vmem:[%s1 + $0x48] sm:$0xff] %vm58, %v1806
  %1823 = vst.msk [vmem:[%s1 + $0x50] sm:$0xff] %vm58, %v1807
  %1824 = vst.msk [vmem:[%s1 + $0x58] sm:$0xff] %vm58, %v1808
  %1825 = vst.msk [vmem:[%s1 + $0x60] sm:$0xff] %vm58, %v1809
  %1826 = vst.msk [vmem:[%s1 + $0x68] sm:$0xff] %vm58, %v1810
  %1827 = vst.msk [vmem:[%s1 + $0x70] sm:$0xff] %vm58, %v1811
  %1828 = vst.msk [vmem:[%s1 + $0x78] sm:$0xff] %vm58, %v1812
  // Predicated region
  $region6: #{window_attention_gfc.3} parent=0 // pred_check
    _
  $region7: #{window_attention_gfc.3} parent=0 // pred_check_branch
    %1830 = sbr.rel (0) target = $region9
  $region8: #{window_attention_gfc.3} parent=0 // pred_region
    _
  $region9: #{window_attention_gfc.3} parent=0 // pred_fallthru
    _
  // Predicated region
  $region10: #{window_attention_gfc.3} parent=0 // pred_check
    _
  $region11: #{window_attention_gfc.3} parent=0 // pred_check_branch
    %1832 = sbr.rel (0) target = $region13
  $region12: #{window_attention_gfc.3} parent=0 // pred_region
    _
  $region13: #{window_attention_gfc.3} parent=0 // pred_fallthru
    _

</llo_original>
